<compile_context>
chip_gen: v7x
topology: tpu7x:2x2x1
jax: 0.10.0
libtpu: 0.0.40
codegen_flags: <defaults>
</compile_context>

<pallas_src>
import functools

import numpy as np
import jax
import jax.numpy as jnp
from jax import lax
from jax.experimental import pallas as pl
from jax.experimental.pallas import tpu as pltpu


def _bilstm_fc_kernel(x_ref, m_ref,
                      wih_f_ref, whh_f_ref, b_f_ref,
                      wih_b_ref, whh_b_ref, b_b_ref,
                      wfc_f_ref, wfc_b_ref, bfc_ref,
                      out_ref,
                      gf_scr, gb_scr, hf_scr, hb_scr):
    S, TB, E = x_ref.shape          # time-major block: (S, batch_tile, E)
    H = whh_f_ref.shape[0]

    # Collapse (S, TB, .) -> (S*TB, .). TB is a multiple of 8 (sublane tile),
    # so this is a layout-preserving leading-dim collapse.
    x2d = x_ref[...].reshape(S * TB, E)
    m2d = m_ref[...].reshape(S * TB, 1)

    # ---- hoisted input projection: one big MXU matmul per direction ---------
    gf_scr[...] = (jnp.dot(x2d, wih_f_ref[...],
                           preferred_element_type=jnp.float32) + b_f_ref[...])
    # Zero the *backward* gates at padded rows: with zero initial state and
    # zero gates, the LSTM cell keeps h == c == 0 exactly, so the backward
    # recurrence (t = S-1 .. 0) only "starts" at t = length-1, reproducing
    # pack_padded_sequence semantics with no per-step mask on the serial chain.
    gb_scr[...] = (jnp.dot(x2d, wih_b_ref[...],
                           preferred_element_type=jnp.float32) + b_b_ref[...]) * m2d

    whh_f = whh_f_ref[...]
    whh_b = whh_b_ref[...]

    h0 = jnp.zeros((TB, H), jnp.float32)
    c0 = jnp.zeros((TB, H), jnp.float32)

    def cell(gx, h, c, whh):
        # Gate column order [i, f, o, g]: one sigmoid (3H), one tanh (H).
        gates = gx + jnp.dot(h, whh, preferred_element_type=jnp.float32)
        ifo = jax.nn.sigmoid(gates[:, :3 * H])
        g = jnp.tanh(gates[:, 3 * H:])
        i = ifo[:, :H]
        f = ifo[:, H:2 * H]
        o = ifo[:, 2 * H:]
        c_new = f * c + i * g
        h_new = o * jnp.tanh(c_new)
        return h_new, c_new

    # ---- forward direction ---------------------------------------------------
    def fwd_body(t, carry):
        h, c = carry
        row = pl.multiple_of(t * TB, 8)
        h, c = cell(gf_scr[pl.ds(row, TB), :], h, c, whh_f)
        hf_scr[pl.ds(row, TB), :] = h
        return (h, c)

    lax.fori_loop(0, S, fwd_body, (h0, c0))

    # ---- backward direction --------------------------------------------------
    def bwd_body(k, carry):
        t = S - 1 - k
        h, c = carry
        row = pl.multiple_of(t * TB, 8)
        h, c = cell(gb_scr[pl.ds(row, TB), :], h, c, whh_b)
        hb_scr[pl.ds(row, TB), :] = h
        return (h, c)

    lax.fori_loop(0, S, bwd_body, (h0, c0))

    # ---- fc = Linear(2H, D) as two big batched matmuls -----------------------
    hf = hf_scr[...] * m2d          # zero forward outputs at padded positions
    hb = hb_scr[...]                # already exactly zero at padded positions
    out2d = (jnp.dot(hf.astype(wfc_f_ref.dtype), wfc_f_ref[...],
                     preferred_element_type=jnp.float32)
             + jnp.dot(hb.astype(wfc_b_ref.dtype), wfc_b_ref[...],
                       preferred_element_type=jnp.float32)
             + bfc_ref[...])
    out_ref[...] = out2d.reshape(S, TB, -1)


def _reorder_gates(w):
    """PyTorch LSTM gate layout [i, f, g, o] -> kernel layout [i, f, o, g]."""
    i, f, g, o = jnp.split(w, 4, axis=-1)
    return jnp.concatenate([i, f, o, g], axis=-1)


def bilstm_fc_pallas(x_tm, m_tm, params, *, batch_tile=8,
                     matmul_dtype=jnp.float32):
    """x_tm: (S, B_pad, E) time-major, m_tm: (S, B_pad, 1) -> (S, B_pad, D)."""
    S, Bp, E = x_tm.shape
    H = params["whh_f"].shape[0]
    D = params["wfc"].shape[1]
    assert batch_tile % 8 == 0 and Bp % batch_tile == 0
    tb = batch_tile
    nb = Bp // tb

    # Weight plumbing: permute PyTorch gate columns, split fc into fwd/bwd
    # halves, cast the big-matmul operands to matmul_dtype (bf16 on v6e/v7x).
    wih_f = _reorder_gates(params["wih_f"]).astype(matmul_dtype)
    wih_b = _reorder_gates(params["wih_b"]).astype(matmul_dtype)
    whh_f = _reorder_gates(params["whh_f"])        # recurrent path stays f32
    whh_b = _reorder_gates(params["whh_b"])
    b_f = _reorder_gates(params["b_f"])
    b_b = _reorder_gates(params["b_b"])
    wfc_f = params["wfc"][:H, :].astype(matmul_dtype)
    wfc_b = params["wfc"][H:, :].astype(matmul_dtype)
    bfc = params["bfc"]
    x_tm = x_tm.astype(matmul_dtype)

    bmap = lambda b: (0, b, 0)      # batch-blocked (S, tb, .) arrays
    wmap = lambda b: (0, 0)         # full weight blocks, resident across grid

    inputs = (x_tm, m_tm,
              wih_f, whh_f, b_f,
              wih_b, whh_b, b_b,
              wfc_f, wfc_b, bfc)
    in_specs = [
        pl.BlockSpec((S, tb, E), bmap),
        pl.BlockSpec((S, tb, 1), bmap),
        pl.BlockSpec(wih_f.shape, wmap),
        pl.BlockSpec(whh_f.shape, wmap),
        pl.BlockSpec(b_f.shape, wmap),
        pl.BlockSpec(wih_b.shape, wmap),
        pl.BlockSpec(whh_b.shape, wmap),
        pl.BlockSpec(b_b.shape, wmap),
        pl.BlockSpec(wfc_f.shape, wmap),
        pl.BlockSpec(wfc_b.shape, wmap),
        pl.BlockSpec(bfc.shape, wmap),
    ]

    return pl.pallas_call(
        _bilstm_fc_kernel,
        out_shape=jax.ShapeDtypeStruct((S, Bp, D), jnp.float32),
        grid=(nb,),
        in_specs=in_specs,
        out_specs=pl.BlockSpec((S, tb, D), bmap),
        scratch_shapes=[pltpu.VMEM((S * tb, 4 * H), jnp.float32),
                        pltpu.VMEM((S * tb, 4 * H), jnp.float32),
                        pltpu.VMEM((S * tb, H), jnp.float32),
                        pltpu.VMEM((S * tb, H), jnp.float32)],
        compiler_params=pltpu.CompilerParams(
            dimension_semantics=("parallel",)),      # batch blocks -> 2 TCs on v7x
    )(*inputs)


def bert_bilstm_encoder_forward(params, input_ids, attention_mask, *,
                                batch_tile=8, matmul_dtype=jnp.float32):
    B, S = input_ids.shape

    # Pad batch to a multiple of the (sublane-aligned) batch tile; padded
    # sequences get length 0 and are sliced away at the end.
    b_pad = -(-B // batch_tile) * batch_tile
    pad = b_pad - B
    ids = jnp.pad(input_ids, ((0, pad), (0, 0)))
    amask = jnp.pad(attention_mask, ((0, pad), (0, 0)))

    # Stand-in for the frozen FlavaTextModel: deterministic embedding lookup,
    # gathered straight into time-major layout (only the small int ids are
    # transposed, never the (S, B, E) activation).
    x_tm = jnp.take(params["emb"], ids.T, axis=0).astype(jnp.float32)  # (S, B_pad, E)

    # length = ||mask||_1 (as in the PyTorch code); packing consumes the first
    # `length` timesteps, so rebuild the exact prefix mask.
    lengths = jnp.sum(amask.astype(jnp.int32), axis=1)
    prefix = (jnp.arange(S)[:, None] < lengths[None, :]).astype(jnp.float32)
    m_tm = prefix[:, :, None]                                          # (S, B_pad, 1)

    out_tm = bilstm_fc_pallas(x_tm, m_tm, params,
                              batch_tile=batch_tile, matmul_dtype=matmul_dtype)
    return jnp.transpose(out_tm, (1, 0, 2))[:B]                        # (B, S, D)


# ---------------------------- pure-JAX reference -----------------------------
def _reference_forward(params, input_ids, attention_mask):
    emb = jnp.take(params["emb"], input_ids, axis=0).astype(jnp.float32)
    B, S, _ = emb.shape
    H = params["whh_f"].shape[0]
    lengths = jnp.sum(attention_mask.astype(jnp.int32), axis=1)
    mask = (jnp.arange(S)[None, :] < lengths[:, None]).astype(jnp.float32)
    hp = jax.lax.Precision.HIGHEST

    def run(wih, whh, b, reverse):
        h = jnp.zeros((B, H), jnp.float32)
        c = jnp.zeros((B, H), jnp.float32)
        outs = [None] * S
        order = range(S - 1, -1, -1) if reverse else range(S)
        for t in order:
            x_t = emb[:, t, :]
            m_t = mask[:, t][:, None]
            gates = (jnp.dot(x_t, wih, precision=hp)
                     + jnp.dot(h, whh, precision=hp) + b)
            i = jax.nn.sigmoid(gates[:, 0:H])
            f = jax.nn.sigmoid(gates[:, H:2 * H])
            g = jnp.tanh(gates[:, 2 * H:3 * H])
            o = jax.nn.sigmoid(gates[:, 3 * H:4 * H])
            c_new = f * c + i * g
            h_new = o * jnp.tanh(c_new)
            outs[t] = m_t * h_new
            h = m_t * h_new + (1.0 - m_t) * h
            c = m_t * c_new + (1.0 - m_t) * c
        return jnp.stack(outs, axis=1)

    fwd = run(params["wih_f"], params["whh_f"], params["b_f"], False)
    bwd = run(params["wih_b"], params["whh_b"], params["b_b"], True)
    rnn = jnp.concatenate([fwd, bwd], axis=-1)
    return jnp.dot(rnn, params["wfc"], precision=hp) + params["bfc"]


# ------------------------------- parameters ----------------------------------
def init_params(key, vocab, E, H, D):
    """Parameters stored in the PyTorch layout (gate order [i, f, g, o])."""
    keys = jax.random.split(key, 9)
    k_lstm = 1.0 / np.sqrt(H)
    k_fc = 1.0 / np.sqrt(2 * H)

    def u(kk, shape, s):
        return jax.random.uniform(kk, shape, jnp.float32, -s, s)

    return {
        "emb": 0.1 * jax.random.normal(keys[0], (vocab, E), jnp.float32),
        # LSTM weights pre-transposed: x @ W_ih (E,4H), h @ W_hh (H,4H)
        "wih_f": u(keys[1], (E, 4 * H), k_lstm),
        "whh_f": u(keys[2], (H, 4 * H), k_lstm),
        "b_f": u(keys[3], (1, 4 * H), k_lstm),   # b_ih + b_hh folded together
        "wih_b": u(keys[4], (E, 4 * H), k_lstm),
        "whh_b": u(keys[5], (H, 4 * H), k_lstm),
        "b_b": u(keys[6], (1, 4 * H), k_lstm),
        "wfc": u(keys[7], (2 * H, D), k_fc),
        "bfc": u(keys[8], (1, D), k_fc),
    }


if __name__ == "__main__":
    # E = bert hidden (proxy), H = blstm hidden (4H = 128 -> lane-dense gates),
    # D = config.hidden_size (128 -> lane-dense output stores).
    # B = 10 pads to 16 -> grid of 2 parallel batch blocks.
    B, S, VOCAB, E, H, D = 10, 8, 64, 128, 32, 128
    key = jax.random.PRNGKey(0)
    k_param, k_ids = jax.random.split(key)
    params = init_params(k_param, VOCAB, E, H, D)

    input_ids = jax.random.randint(k_ids, (B, S), 0, VOCAB, dtype=jnp.int32)
    lengths = jnp.array([8, 5, 8, 3, 1, 7, 8, 2, 6, 4], dtype=jnp.int32)
    attention_mask = (jnp.arange(S)[None, :] < lengths[:, None]).astype(jnp.int32)

    fwd = jax.jit(functools.partial(bert_bilstm_encoder_forward, params))
    out = jax.block_until_ready(fwd(input_ids, attention_mask))

    ref = _reference_forward(params, input_ids, attention_mask)
    np.testing.assert_allclose(np.asarray(out), np.asarray(ref),
                               rtol=5e-3, atol=5e-3)
    assert out.shape == (B, S, D)
    print("KERNEL_OK")
</pallas_src>

<mosaic_0001>
module attributes {stable_mosaic.version = 11 : i64} {
  func.func @_bilstm_fc_kernel(%arg0: i32, %arg1: memref<8x8x128xf32, #tpu.memory_space<vmem>>, %arg2: memref<8x8x1xf32, #tpu.memory_space<vmem>>, %arg3: memref<128x128xf32, #tpu.memory_space<vmem>>, %arg4: memref<32x128xf32, #tpu.memory_space<vmem>>, %arg5: memref<1x128xf32, #tpu.memory_space<vmem>>, %arg6: memref<128x128xf32, #tpu.memory_space<vmem>>, %arg7: memref<32x128xf32, #tpu.memory_space<vmem>>, %arg8: memref<1x128xf32, #tpu.memory_space<vmem>>, %arg9: memref<32x128xf32, #tpu.memory_space<vmem>>, %arg10: memref<32x128xf32, #tpu.memory_space<vmem>>, %arg11: memref<1x128xf32, #tpu.memory_space<vmem>>, %arg12: memref<8x8x128xf32, #tpu.memory_space<vmem>>, %arg13: memref<64x128xf32, #tpu.memory_space<vmem>>, %arg14: memref<64x128xf32, #tpu.memory_space<vmem>>, %arg15: memref<64x32xf32, #tpu.memory_space<vmem>>, %arg16: memref<64x32xf32, #tpu.memory_space<vmem>>) attributes {dimension_semantics = [#tpu.dimension_semantics<parallel>], iteration_bounds = array<i64: 2>, scalar_prefetch = 0 : i64, scratch_operands = 4 : i64, tpu.core_type = #tpu.core_type<tc>, window_params = [{transform_indices = @transform_0, window_bounds = array<i64: 8, 8, 128>}, {transform_indices = @transform_1, window_bounds = array<i64: 8, 8, 1>}, {pipeline_mode = #tpu.pipeline_mode<synchronous>, transform_indices = @transform_2, window_bounds = array<i64: 128, 128>}, {pipeline_mode = #tpu.pipeline_mode<synchronous>, transform_indices = @transform_3, window_bounds = array<i64: 32, 128>}, {pipeline_mode = #tpu.pipeline_mode<synchronous>, transform_indices = @transform_4, window_bounds = array<i64: 1, 128>}, {pipeline_mode = #tpu.pipeline_mode<synchronous>, transform_indices = @transform_5, window_bounds = array<i64: 128, 128>}, {pipeline_mode = #tpu.pipeline_mode<synchronous>, transform_indices = @transform_6, window_bounds = array<i64: 32, 128>}, {pipeline_mode = #tpu.pipeline_mode<synchronous>, transform_indices = @transform_7, window_bounds = array<i64: 1, 128>}, {pipeline_mode = #tpu.pipeline_mode<synchronous>, transform_indices = @transform_8, window_bounds = array<i64: 32, 128>}, {pipeline_mode = #tpu.pipeline_mode<synchronous>, transform_indices = @transform_9, window_bounds = array<i64: 32, 128>}, {pipeline_mode = #tpu.pipeline_mode<synchronous>, transform_indices = @transform_10, window_bounds = array<i64: 1, 128>}, {transform_indices = @transform_11, window_bounds = array<i64: 8, 8, 128>}]} {
    %c0 = arith.constant 0 : index
    %c0_0 = arith.constant 0 : index
    %c0_1 = arith.constant 0 : index
    %0 = vector.load %arg1[%c0, %c0_0, %c0_1] : memref<8x8x128xf32, #tpu.memory_space<vmem>>, vector<8x8x128xf32>
    %1 = vector.shape_cast %0 : vector<8x8x128xf32> to vector<64x128xf32>
    %c0_2 = arith.constant 0 : index
    %c0_3 = arith.constant 0 : index
    %c0_4 = arith.constant 0 : index
    %2 = vector.load %arg2[%c0_2, %c0_3, %c0_4] : memref<8x8x1xf32, #tpu.memory_space<vmem>>, vector<8x8x1xf32>
    %3 = vector.shape_cast %2 : vector<8x8x1xf32> to vector<64x1xf32>
    %c0_5 = arith.constant 0 : index
    %c0_6 = arith.constant 0 : index
    %4 = vector.load %arg3[%c0_5, %c0_6] : memref<128x128xf32, #tpu.memory_space<vmem>>, vector<128x128xf32>
    %cst = arith.constant dense<0.000000e+00> : vector<64x128xf32>
    %5 = tpu.matmul %1, %4, %cst {dimension_numbers = #tpu.dot_dimension_numbers<[1], [0], [0], [1], [0, 0, 1, 1], [], []>} : vector<64x128xf32>, vector<128x128xf32>, vector<64x128xf32> -> vector<64x128xf32>
    %c0_7 = arith.constant 0 : index
    %c0_8 = arith.constant 0 : index
    %6 = vector.load %arg5[%c0_7, %c0_8] : memref<1x128xf32, #tpu.memory_space<vmem>>, vector<1x128xf32>
    %7 = vector.broadcast %6 : vector<1x128xf32> to vector<64x128xf32>
    %8 = arith.addf %5, %7 : vector<64x128xf32>
    %c0_9 = arith.constant 0 : index
    %c0_10 = arith.constant 0 : index
    %9 = vector.load %arg13[%c0_9, %c0_10] : memref<64x128xf32, #tpu.memory_space<vmem>>, vector<64x128xf32>
    tpu.vector_store %arg13[%c0_9, %c0_10], %8 {strides = array<i32>} : memref<64x128xf32, #tpu.memory_space<vmem>>, vector<64x128xf32>,
    %c0_11 = arith.constant 0 : index
    %c0_12 = arith.constant 0 : index
    %10 = vector.load %arg6[%c0_11, %c0_12] : memref<128x128xf32, #tpu.memory_space<vmem>>, vector<128x128xf32>
    %cst_13 = arith.constant dense<0.000000e+00> : vector<64x128xf32>
    %11 = tpu.matmul %1, %10, %cst_13 {dimension_numbers = #tpu.dot_dimension_numbers<[1], [0], [0], [1], [0, 0, 1, 1], [], []>} : vector<64x128xf32>, vector<128x128xf32>, vector<64x128xf32> -> vector<64x128xf32>
    %c0_14 = arith.constant 0 : index
    %c0_15 = arith.constant 0 : index
    %12 = vector.load %arg8[%c0_14, %c0_15] : memref<1x128xf32, #tpu.memory_space<vmem>>, vector<1x128xf32>
    %13 = vector.broadcast %12 : vector<1x128xf32> to vector<64x128xf32>
    %14 = arith.addf %11, %13 : vector<64x128xf32>
    %15 = vector.broadcast %3 : vector<64x1xf32> to vector<64x128xf32>
    %16 = arith.mulf %14, %15 : vector<64x128xf32>
    %c0_16 = arith.constant 0 : index
    %c0_17 = arith.constant 0 : index
    %17 = vector.load %arg14[%c0_16, %c0_17] : memref<64x128xf32, #tpu.memory_space<vmem>>, vector<64x128xf32>
    tpu.vector_store %arg14[%c0_16, %c0_17], %16 {strides = array<i32>} : memref<64x128xf32, #tpu.memory_space<vmem>>, vector<64x128xf32>,
    %c0_18 = arith.constant 0 : index
    %c0_19 = arith.constant 0 : index
    %18 = vector.load %arg4[%c0_18, %c0_19] : memref<32x128xf32, #tpu.memory_space<vmem>>, vector<32x128xf32>
    %c0_20 = arith.constant 0 : index
    %c0_21 = arith.constant 0 : index
    %19 = vector.load %arg7[%c0_20, %c0_21] : memref<32x128xf32, #tpu.memory_space<vmem>>, vector<32x128xf32>
    %cst_22 = arith.constant 0.000000e+00 : f32
    %20 = vector.broadcast %cst_22 : f32 to vector<8x32xf32>
    %cst_23 = arith.constant 0.000000e+00 : f32
    %21 = vector.broadcast %cst_23 : f32 to vector<8x32xf32>
    %c0_i32 = arith.constant 0 : i32
    %c8_i32 = arith.constant 8 : i32
    %22 = arith.addi %c0_i32, %c8_i32 : i32
    %c1_i32 = arith.constant 1 : i32
    %23:2 = scf.for %arg17 = %c0_i32 to %22 step %c1_i32 iter_args(%arg18 = %20, %arg19 = %21) -> (vector<8x32xf32>, vector<8x32xf32>)  : i32 {
      %c8_i32_44 = arith.constant 8 : i32
      %40 = arith.muli %arg17, %c8_i32_44 : i32
      %41 = tpu.assume_multiple %40, 8 : i32
      %42 = arith.index_cast %41 : i32 to index
      %c0_45 = arith.constant 0 : index
      %43 = vector.load %arg13[%42, %c0_45] : memref<64x128xf32, #tpu.memory_space<vmem>>, vector<8x128xf32>
      %cst_46 = arith.constant dense<0.000000e+00> : vector<8x128xf32>
      %44 = tpu.matmul %arg18, %18, %cst_46 {dimension_numbers = #tpu.dot_dimension_numbers<[1], [0], [0], [1], [0, 0, 1, 1], [], []>} : vector<8x32xf32>, vector<32x128xf32>, vector<8x128xf32> -> vector<8x128xf32>
      %45 = arith.addf %43, %44 : vector<8x128xf32>
      %46 = vector.extract_strided_slice %45 {offsets = [0, 0], sizes = [8, 96], strides = [1, 1]} : vector<8x128xf32> to vector<8x96xf32>
      %47 = arith.negf %46 : vector<8x96xf32>
      %48 = math.exp %47 : vector<8x96xf32>
      %cst_47 = arith.constant 1.000000e+00 : f32
      %49 = vector.broadcast %cst_47 : f32 to vector<8x96xf32>
      %50 = arith.addf %49, %48 : vector<8x96xf32>
      %51 = arith.divf %49, %50 : vector<8x96xf32>
      %52 = vector.extract_strided_slice %45 {offsets = [0, 96], sizes = [8, 32], strides = [1, 1]} : vector<8x128xf32> to vector<8x32xf32>
      %53 = math.tanh %52 : vector<8x32xf32>
      %54 = vector.extract_strided_slice %51 {offsets = [0, 0], sizes = [8, 32], strides = [1, 1]} : vector<8x96xf32> to vector<8x32xf32>
      %55 = vector.extract_strided_slice %51 {offsets = [0, 32], sizes = [8, 32], strides = [1, 1]} : vector<8x96xf32> to vector<8x32xf32>
      %56 = vector.extract_strided_slice %51 {offsets = [0, 64], sizes = [8, 32], strides = [1, 1]} : vector<8x96xf32> to vector<8x32xf32>
      %57 = arith.mulf %55, %arg19 : vector<8x32xf32>
      %58 = arith.mulf %54, %53 : vector<8x32xf32>
      %59 = arith.addf %57, %58 : vector<8x32xf32>
      %60 = math.tanh %59 : vector<8x32xf32>
      %61 = arith.mulf %56, %60 : vector<8x32xf32>
      %62 = arith.index_cast %41 : i32 to index
      %c0_48 = arith.constant 0 : index
      %63 = vector.load %arg15[%62, %c0_48] : memref<64x32xf32, #tpu.memory_space<vmem>>, vector<8x32xf32>
      tpu.vector_store %arg15[%62, %c0_48], %61 {strides = array<i32>} : memref<64x32xf32, #tpu.memory_space<vmem>>, vector<8x32xf32>,
      scf.yield %61, %59 : vector<8x32xf32>, vector<8x32xf32>
    }
    %c8_i32_24 = arith.constant 8 : i32
    %c0_i32_25 = arith.constant 0 : i32
    %c8_i32_26 = arith.constant 8 : i32
    %24 = arith.addi %c0_i32_25, %c8_i32_26 : i32
    %c1_i32_27 = arith.constant 1 : i32
    %25:2 = scf.for %arg17 = %c0_i32_25 to %24 step %c1_i32_27 iter_args(%arg18 = %20, %arg19 = %21) -> (vector<8x32xf32>, vector<8x32xf32>)  : i32 {
      %c7_i32 = arith.constant 7 : i32
      %40 = arith.subi %c7_i32, %arg17 : i32
      %c8_i32_44 = arith.constant 8 : i32
      %41 = arith.muli %40, %c8_i32_44 : i32
      %42 = tpu.assume_multiple %41, 8 : i32
      %43 = arith.index_cast %42 : i32 to index
      %c0_45 = arith.constant 0 : index
      %44 = vector.load %arg14[%43, %c0_45] : memref<64x128xf32, #tpu.memory_space<vmem>>, vector<8x128xf32>
      %cst_46 = arith.constant dense<0.000000e+00> : vector<8x128xf32>
      %45 = tpu.matmul %arg18, %19, %cst_46 {dimension_numbers = #tpu.dot_dimension_numbers<[1], [0], [0], [1], [0, 0, 1, 1], [], []>} : vector<8x32xf32>, vector<32x128xf32>, vector<8x128xf32> -> vector<8x128xf32>
      %46 = arith.addf %44, %45 : vector<8x128xf32>
      %47 = vector.extract_strided_slice %46 {offsets = [0, 0], sizes = [8, 96], strides = [1, 1]} : vector<8x128xf32> to vector<8x96xf32>
      %48 = arith.negf %47 : vector<8x96xf32>
      %49 = math.exp %48 : vector<8x96xf32>
      %cst_47 = arith.constant 1.000000e+00 : f32
      %50 = vector.broadcast %cst_47 : f32 to vector<8x96xf32>
      %51 = arith.addf %50, %49 : vector<8x96xf32>
      %52 = arith.divf %50, %51 : vector<8x96xf32>
      %53 = vector.extract_strided_slice %46 {offsets = [0, 96], sizes = [8, 32], strides = [1, 1]} : vector<8x128xf32> to vector<8x32xf32>
      %54 = math.tanh %53 : vector<8x32xf32>
      %55 = vector.extract_strided_slice %52 {offsets = [0, 0], sizes = [8, 32], strides = [1, 1]} : vector<8x96xf32> to vector<8x32xf32>
      %56 = vector.extract_strided_slice %52 {offsets = [0, 32], sizes = [8, 32], strides = [1, 1]} : vector<8x96xf32> to vector<8x32xf32>
      %57 = vector.extract_strided_slice %52 {offsets = [0, 64], sizes = [8, 32], strides = [1, 1]} : vector<8x96xf32> to vector<8x32xf32>
      %58 = arith.mulf %56, %arg19 : vector<8x32xf32>
      %59 = arith.mulf %55, %54 : vector<8x32xf32>
      %60 = arith.addf %58, %59 : vector<8x32xf32>
      %61 = math.tanh %60 : vector<8x32xf32>
      %62 = arith.mulf %57, %61 : vector<8x32xf32>
      %63 = arith.index_cast %42 : i32 to index
      %c0_48 = arith.constant 0 : index
      %64 = vector.load %arg16[%63, %c0_48] : memref<64x32xf32, #tpu.memory_space<vmem>>, vector<8x32xf32>
      tpu.vector_store %arg16[%63, %c0_48], %62 {strides = array<i32>} : memref<64x32xf32, #tpu.memory_space<vmem>>, vector<8x32xf32>,
      scf.yield %62, %60 : vector<8x32xf32>, vector<8x32xf32>
    }
    %c8_i32_28 = arith.constant 8 : i32
    %c0_29 = arith.constant 0 : index
    %c0_30 = arith.constant 0 : index
    %26 = vector.load %arg15[%c0_29, %c0_30] : memref<64x32xf32, #tpu.memory_space<vmem>>, vector<64x32xf32>
    %27 = vector.broadcast %3 : vector<64x1xf32> to vector<64x32xf32>
    %28 = arith.mulf %26, %27 : vector<64x32xf32>
    %c0_31 = arith.constant 0 : index
    %c0_32 = arith.constant 0 : index
    %29 = vector.load %arg16[%c0_31, %c0_32] : memref<64x32xf32, #tpu.memory_space<vmem>>, vector<64x32xf32>
    %c0_33 = arith.constant 0 : index
    %c0_34 = arith.constant 0 : index
    %30 = vector.load %arg9[%c0_33, %c0_34] : memref<32x128xf32, #tpu.memory_space<vmem>>, vector<32x128xf32>
    %cst_35 = arith.constant dense<0.000000e+00> : vector<64x128xf32>
    %31 = tpu.matmul %28, %30, %cst_35 {dimension_numbers = #tpu.dot_dimension_numbers<[1], [0], [0], [1], [0, 0, 1, 1], [], []>} : vector<64x32xf32>, vector<32x128xf32>, vector<64x128xf32> -> vector<64x128xf32>
    %c0_36 = arith.constant 0 : index
    %c0_37 = arith.constant 0 : index
    %32 = vector.load %arg10[%c0_36, %c0_37] : memref<32x128xf32, #tpu.memory_space<vmem>>, vector<32x128xf32>
    %cst_38 = arith.constant dense<0.000000e+00> : vector<64x128xf32>
    %33 = tpu.matmul %29, %32, %cst_38 {dimension_numbers = #tpu.dot_dimension_numbers<[1], [0], [0], [1], [0, 0, 1, 1], [], []>} : vector<64x32xf32>, vector<32x128xf32>, vector<64x128xf32> -> vector<64x128xf32>
    %34 = arith.addf %31, %33 : vector<64x128xf32>
    %c0_39 = arith.constant 0 : index
    %c0_40 = arith.constant 0 : index
    %35 = vector.load %arg11[%c0_39, %c0_40] : memref<1x128xf32, #tpu.memory_space<vmem>>, vector<1x128xf32>
    %36 = vector.broadcast %35 : vector<1x128xf32> to vector<64x128xf32>
    %37 = arith.addf %34, %36 : vector<64x128xf32>
    %38 = vector.shape_cast %37 : vector<64x128xf32> to vector<8x8x128xf32>
    %c0_41 = arith.constant 0 : index
    %c0_42 = arith.constant 0 : index
    %c0_43 = arith.constant 0 : index
    %39 = vector.load %arg12[%c0_41, %c0_42, %c0_43] : memref<8x8x128xf32, #tpu.memory_space<vmem>>, vector<8x8x128xf32>
    tpu.vector_store %arg12[%c0_41, %c0_42, %c0_43], %38 {strides = array<i32>} : memref<8x8x128xf32, #tpu.memory_space<vmem>>, vector<8x8x128xf32>,
    return
  }
  func.func @transform_0(%arg0: i32) -> (i32, i32, i32) {
    %c0_i32 = arith.constant 0 : i32
    %c0_i32_0 = arith.constant 0 : i32
    %c0_i32_1 = arith.constant 0 : i32
    return %c0_i32, %arg0, %c0_i32_0 : i32, i32, i32
  }
  func.func @transform_1(%arg0: i32) -> (i32, i32, i32) {
    %c0_i32 = arith.constant 0 : i32
    %c0_i32_0 = arith.constant 0 : i32
    %c0_i32_1 = arith.constant 0 : i32
    return %c0_i32, %arg0, %c0_i32_0 : i32, i32, i32
  }
  func.func @transform_2(%arg0: i32) -> (i32, i32) {
    %c0_i32 = arith.constant 0 : i32
    %c0_i32_0 = arith.constant 0 : i32
    %c0_i32_1 = arith.constant 0 : i32
    return %c0_i32, %c0_i32_0 : i32, i32
  }
  func.func @transform_3(%arg0: i32) -> (i32, i32) {
    %c0_i32 = arith.constant 0 : i32
    %c0_i32_0 = arith.constant 0 : i32
    %c0_i32_1 = arith.constant 0 : i32
    return %c0_i32, %c0_i32_0 : i32, i32
  }
  func.func @transform_4(%arg0: i32) -> (i32, i32) {
    %c0_i32 = arith.constant 0 : i32
    %c0_i32_0 = arith.constant 0 : i32
    %c0_i32_1 = arith.constant 0 : i32
    return %c0_i32, %c0_i32_0 : i32, i32
  }
  func.func @transform_5(%arg0: i32) -> (i32, i32) {
    %c0_i32 = arith.constant 0 : i32
    %c0_i32_0 = arith.constant 0 : i32
    %c0_i32_1 = arith.constant 0 : i32
    return %c0_i32, %c0_i32_0 : i32, i32
  }
  func.func @transform_6(%arg0: i32) -> (i32, i32) {
    %c0_i32 = arith.constant 0 : i32
    %c0_i32_0 = arith.constant 0 : i32
    %c0_i32_1 = arith.constant 0 : i32
    return %c0_i32, %c0_i32_0 : i32, i32
  }
  func.func @transform_7(%arg0: i32) -> (i32, i32) {
    %c0_i32 = arith.constant 0 : i32
    %c0_i32_0 = arith.constant 0 : i32
    %c0_i32_1 = arith.constant 0 : i32
    return %c0_i32, %c0_i32_0 : i32, i32
  }
  func.func @transform_8(%arg0: i32) -> (i32, i32) {
    %c0_i32 = arith.constant 0 : i32
    %c0_i32_0 = arith.constant 0 : i32
    %c0_i32_1 = arith.constant 0 : i32
    return %c0_i32, %c0_i32_0 : i32, i32
  }
  func.func @transform_9(%arg0: i32) -> (i32, i32) {
    %c0_i32 = arith.constant 0 : i32
    %c0_i32_0 = arith.constant 0 : i32
    %c0_i32_1 = arith.constant 0 : i32
    return %c0_i32, %c0_i32_0 : i32, i32
  }
  func.func @transform_10(%arg0: i32) -> (i32, i32) {
    %c0_i32 = arith.constant 0 : i32
    %c0_i32_0 = arith.constant 0 : i32
    %c0_i32_1 = arith.constant 0 : i32
    return %c0_i32, %c0_i32_0 : i32, i32
  }
  func.func @transform_11(%arg0: i32) -> (i32, i32, i32) {
    %c0_i32 = arith.constant 0 : i32
    %c0_i32_0 = arith.constant 0 : i32
    %c0_i32_1 = arith.constant 0 : i32
    return %c0_i32, %arg0, %c0_i32_0 : i32, i32, i32
  }
}

</mosaic_0001>

<llo_original>
// kernel: bert_bilstm_encoder_forward.1
$region0: #{bert_bilstm_encoder_forward.1}
  #allocation0 [shape = 'u32[]', space=smem, size = 0x4, offset = 0x4, fixed_abs, tag = 'smem constant byte address 0x4 - core index']
  #allocation1 [shape = 'u32[144,128]{1,0:T(1,128)}', space=vmem, size = 0x12000, scoped, tag = 'internal scratch']
  #allocation2 [shape = 'f32[64,128]{1,0:T(8,128)}', space=vmem, size = 0x8000, scoped, tag = 'scratch operand']
  #allocation3 [shape = 'f32[64,128]{1,0:T(8,128)}', space=vmem, size = 0x8000, scoped, tag = 'scratch operand']
  #allocation4 [shape = 'f32[64,32]{1,0:T(8,128)}', space=vmem, size = 0x8000, scoped, tag = 'scratch operand']
  #allocation5 [shape = 'f32[64,32]{1,0:T(8,128)}', space=vmem, size = 0x8000, scoped, tag = 'scratch operand']
  %s0 = inlined_call_operand.vmem [shape: f32[8,16,128], index: 0, kind: input, shape index: {}]
  %s1 = inlined_call_operand.vmem [shape: f32[8,16,1], index: 1, kind: input, shape index: {}]
  %s2 = inlined_call_operand.vmem [shape: f32[128,128], index: 2, kind: input, shape index: {}]
  %s3 = inlined_call_operand.vmem [shape: f32[32,128], index: 3, kind: input, shape index: {}]
  %s4 = inlined_call_operand.vmem [shape: f32[1,128], index: 4, kind: input, shape index: {}]
  %s5 = inlined_call_operand.vmem [shape: f32[128,128], index: 5, kind: input, shape index: {}]
  %s6 = inlined_call_operand.vmem [shape: f32[32,128], index: 6, kind: input, shape index: {}]
  %s7 = inlined_call_operand.vmem [shape: f32[1,128], index: 7, kind: input, shape index: {}]
  %s8 = inlined_call_operand.vmem [shape: f32[32,128], index: 8, kind: input, shape index: {}]
  %s9 = inlined_call_operand.vmem [shape: f32[32,128], index: 9, kind: input, shape index: {}]
  %s10 = inlined_call_operand.vmem [shape: f32[1,128], index: 10, kind: input, shape index: {}]
  %s11 = inlined_call_operand.vmem [shape: f32[8,16,128], index: 11, kind: output, shape index: {}]
  %s12 = sld [smem:[#allocation0]]
  $region201: #{bert_bilstm_encoder_forward.1} parent=0
    _
  %s14 = ssub.s32 1, %s12
  %s15 = scalar_select 0, %s14, %s12
  $region1: #{bert_bilstm_encoder_forward.1} parent=0
    #allocation6 [shape = 'u8[65536]{0}', space=vmem, size = 0x10000, scoped, tag = 'input window, operand 0']
    #allocation7 [shape = 'u8[65536]{0}', space=vmem, size = 0x10000, scoped, tag = 'input window, operand 1']
    #allocation8 [shape = 'u8[65536]{0}', space=vmem, size = 0x10000, scoped, tag = 'output window, operand 0']
    loop: start=0, step=1, limit=4
    $region2: #{bert_bilstm_encoder_forward.1} parent=1 // loop_pre_header
      _
    $region3: #{bert_bilstm_encoder_forward.1} parent=1 // loop_header
      %s17 = sphi 0, %s21
      %p18 = scmp.ge.s32.totalorder %s17, 4
      %s27 = sphi 0, %s29
      %s30 = sphi 0, %s27
      %s31 = sphi 0, %s30
      %s47 = sphi 0, %s31
      %s53 = sphi 0, %s55
      %s56 = sphi 0, %s53
      %s57 = sphi 0, %s56
      %s73 = sphi 0, %s57
      %s77 = sphi 0, %s77
      %s79 = sphi 0, %s77
      %s80 = sphi 0, %s79
      %s94 = sphi 0, %s80
      %s98 = sphi 0, %s98
      %s100 = sphi 0, %s98
      %s101 = sphi 0, %s100
      %s115 = sphi 0, %s101
      %s119 = sphi 0, %s119
      %s121 = sphi 0, %s119
      %s122 = sphi 0, %s121
      %s136 = sphi 0, %s122
      %s140 = sphi 0, %s140
      %s142 = sphi 0, %s140
      %s143 = sphi 0, %s142
      %s157 = sphi 0, %s143
      %s161 = sphi 0, %s161
      %s163 = sphi 0, %s161
      %s164 = sphi 0, %s163
      %s178 = sphi 0, %s164
      %s182 = sphi 0, %s182
      %s184 = sphi 0, %s182
      %s185 = sphi 0, %s184
      %s199 = sphi 0, %s185
      %s203 = sphi 0, %s203
      %s205 = sphi 0, %s203
      %s206 = sphi 0, %s205
      %s220 = sphi 0, %s206
      %s224 = sphi 0, %s224
      %s226 = sphi 0, %s224
      %s227 = sphi 0, %s226
      %s241 = sphi 0, %s227
      %s245 = sphi 0, %s245
      %s247 = sphi 0, %s245
      %s248 = sphi 0, %s247
      %s262 = sphi 0, %s248
      %s268 = sphi 0, %s270
      %s271 = sphi 0, %s268
      %s272 = sphi 0, %s271
      %s288 = sphi 0, %s272
    $region4: #{bert_bilstm_encoder_forward.1} parent=1 // loop_header_branch
      %20 = sbr.rel (%p18) target = $region8
    $region5: #{bert_bilstm_encoder_forward.1} parent=1 // loop_body
      %s22 = ssub.s32 %s17, 1
      %s23 = ssub.s32 %s17, 2
      %s24 = sadd.s32 %s17, 1
      %s25 = ssub.s32 %s17, %s24
      %p26 = scmp.eq.s32.totalorder %s25, 0
      %s28 = sadd.s32 %s27, 1
      %s29 = scalar_select %p26, %s27, %s28
      %p32 = pneg %p26
      %p33 = scmp.eq.s32.totalorder %s17, 1
      %p34 = por %p32, %p33
      %p35 = scmp.ne.s32.totalorder %s27, %s30
      %p36 = scmp.eq.s32.totalorder %s17, 0
      %p37 = por %p35, %p36
      %p38 = scmp.ne.s32.totalorder %s27, %s30
      %p39 = scmp.eq.s32.totalorder %s22, 1
      %p40 = por %p38, %p39
      %p41 = scmp.ne.s32.totalorder %s30, %s31
      %p42 = scmp.eq.s32.totalorder %s22, 0
      %p43 = por %p41, %p42
      %p44 = scmp.ne.s32.totalorder %s30, %s31
      %p45 = scmp.eq.s32.totalorder %s23, 1
      %p46 = por %p44, %p45
      %p48 = scmp.ne.s32.totalorder %s31, %s47
      %p49 = scmp.eq.s32.totalorder %s23, 0
      %p50 = por %p48, %p49
      %s51 = ssub.s32 %s17, %s24
      %p52 = scmp.eq.s32.totalorder %s51, 0
      %s54 = sadd.s32 %s53, 1
      %s55 = scalar_select %p52, %s53, %s54
      %p58 = pneg %p52
      %p59 = scmp.eq.s32.totalorder %s17, 1
      %p60 = por %p58, %p59
      %p61 = scmp.ne.s32.totalorder %s53, %s56
      %p62 = scmp.eq.s32.totalorder %s17, 0
      %p63 = por %p61, %p62
      %p64 = scmp.ne.s32.totalorder %s53, %s56
      %p65 = scmp.eq.s32.totalorder %s22, 1
      %p66 = por %p64, %p65
      %p67 = scmp.ne.s32.totalorder %s56, %s57
      %p68 = scmp.eq.s32.totalorder %s22, 0
      %p69 = por %p67, %p68
      %p70 = scmp.ne.s32.totalorder %s56, %s57
      %p71 = scmp.eq.s32.totalorder %s23, 1
      %p72 = por %p70, %p71
      %p74 = scmp.ne.s32.totalorder %s57, %s73
      %p75 = scmp.eq.s32.totalorder %s23, 0
      %p76 = por %p74, %p75
      %s78 = sadd.s32 %s77, 1
      %p81 = scmp.eq.s32.totalorder %s17, 1
      %p82 = scmp.ne.s32.totalorder %s77, %s79
      %p83 = scmp.eq.s32.totalorder %s17, 0
      %p84 = por %p82, %p83
      %p85 = scmp.ne.s32.totalorder %s77, %s79
      %p86 = scmp.eq.s32.totalorder %s22, 1
      %p87 = por %p85, %p86
      %p88 = scmp.ne.s32.totalorder %s79, %s80
      %p89 = scmp.eq.s32.totalorder %s22, 0
      %p90 = por %p88, %p89
      %p91 = scmp.ne.s32.totalorder %s79, %s80
      %p92 = scmp.eq.s32.totalorder %s23, 1
      %p93 = por %p91, %p92
      %p95 = scmp.ne.s32.totalorder %s80, %s94
      %p96 = scmp.eq.s32.totalorder %s23, 0
      %p97 = por %p95, %p96
      %s99 = sadd.s32 %s98, 1
      %p102 = scmp.eq.s32.totalorder %s17, 1
      %p103 = scmp.ne.s32.totalorder %s98, %s100
      %p104 = scmp.eq.s32.totalorder %s17, 0
      %p105 = por %p103, %p104
      %p106 = scmp.ne.s32.totalorder %s98, %s100
      %p107 = scmp.eq.s32.totalorder %s22, 1
      %p108 = por %p106, %p107
      %p109 = scmp.ne.s32.totalorder %s100, %s101
      %p110 = scmp.eq.s32.totalorder %s22, 0
      %p111 = por %p109, %p110
      %p112 = scmp.ne.s32.totalorder %s100, %s101
      %p113 = scmp.eq.s32.totalorder %s23, 1
      %p114 = por %p112, %p113
      %p116 = scmp.ne.s32.totalorder %s101, %s115
      %p117 = scmp.eq.s32.totalorder %s23, 0
      %p118 = por %p116, %p117
      %s120 = sadd.s32 %s119, 1
      %p123 = scmp.eq.s32.totalorder %s17, 1
      %p124 = scmp.ne.s32.totalorder %s119, %s121
      %p125 = scmp.eq.s32.totalorder %s17, 0
      %p126 = por %p124, %p125
      %p127 = scmp.ne.s32.totalorder %s119, %s121
      %p128 = scmp.eq.s32.totalorder %s22, 1
      %p129 = por %p127, %p128
      %p130 = scmp.ne.s32.totalorder %s121, %s122
      %p131 = scmp.eq.s32.totalorder %s22, 0
      %p132 = por %p130, %p131
      %p133 = scmp.ne.s32.totalorder %s121, %s122
      %p134 = scmp.eq.s32.totalorder %s23, 1
      %p135 = por %p133, %p134
      %p137 = scmp.ne.s32.totalorder %s122, %s136
      %p138 = scmp.eq.s32.totalorder %s23, 0
      %p139 = por %p137, %p138
      %s141 = sadd.s32 %s140, 1
      %p144 = scmp.eq.s32.totalorder %s17, 1
      %p145 = scmp.ne.s32.totalorder %s140, %s142
      %p146 = scmp.eq.s32.totalorder %s17, 0
      %p147 = por %p145, %p146
      %p148 = scmp.ne.s32.totalorder %s140, %s142
      %p149 = scmp.eq.s32.totalorder %s22, 1
      %p150 = por %p148, %p149
      %p151 = scmp.ne.s32.totalorder %s142, %s143
      %p152 = scmp.eq.s32.totalorder %s22, 0
      %p153 = por %p151, %p152
      %p154 = scmp.ne.s32.totalorder %s142, %s143
      %p155 = scmp.eq.s32.totalorder %s23, 1
      %p156 = por %p154, %p155
      %p158 = scmp.ne.s32.totalorder %s143, %s157
      %p159 = scmp.eq.s32.totalorder %s23, 0
      %p160 = por %p158, %p159
      %s162 = sadd.s32 %s161, 1
      %p165 = scmp.eq.s32.totalorder %s17, 1
      %p166 = scmp.ne.s32.totalorder %s161, %s163
      %p167 = scmp.eq.s32.totalorder %s17, 0
      %p168 = por %p166, %p167
      %p169 = scmp.ne.s32.totalorder %s161, %s163
      %p170 = scmp.eq.s32.totalorder %s22, 1
      %p171 = por %p169, %p170
      %p172 = scmp.ne.s32.totalorder %s163, %s164
      %p173 = scmp.eq.s32.totalorder %s22, 0
      %p174 = por %p172, %p173
      %p175 = scmp.ne.s32.totalorder %s163, %s164
      %p176 = scmp.eq.s32.totalorder %s23, 1
      %p177 = por %p175, %p176
      %p179 = scmp.ne.s32.totalorder %s164, %s178
      %p180 = scmp.eq.s32.totalorder %s23, 0
      %p181 = por %p179, %p180
      %s183 = sadd.s32 %s182, 1
      %p186 = scmp.eq.s32.totalorder %s17, 1
      %p187 = scmp.ne.s32.totalorder %s182, %s184
      %p188 = scmp.eq.s32.totalorder %s17, 0
      %p189 = por %p187, %p188
      %p190 = scmp.ne.s32.totalorder %s182, %s184
      %p191 = scmp.eq.s32.totalorder %s22, 1
      %p192 = por %p190, %p191
      %p193 = scmp.ne.s32.totalorder %s184, %s185
      %p194 = scmp.eq.s32.totalorder %s22, 0
      %p195 = por %p193, %p194
      %p196 = scmp.ne.s32.totalorder %s184, %s185
      %p197 = scmp.eq.s32.totalorder %s23, 1
      %p198 = por %p196, %p197
      %p200 = scmp.ne.s32.totalorder %s185, %s199
      %p201 = scmp.eq.s32.totalorder %s23, 0
      %p202 = por %p200, %p201
      %s204 = sadd.s32 %s203, 1
      %p207 = scmp.eq.s32.totalorder %s17, 1
      %p208 = scmp.ne.s32.totalorder %s203, %s205
      %p209 = scmp.eq.s32.totalorder %s17, 0
      %p210 = por %p208, %p209
      %p211 = scmp.ne.s32.totalorder %s203, %s205
      %p212 = scmp.eq.s32.totalorder %s22, 1
      %p213 = por %p211, %p212
      %p214 = scmp.ne.s32.totalorder %s205, %s206
      %p215 = scmp.eq.s32.totalorder %s22, 0
      %p216 = por %p214, %p215
      %p217 = scmp.ne.s32.totalorder %s205, %s206
      %p218 = scmp.eq.s32.totalorder %s23, 1
      %p219 = por %p217, %p218
      %p221 = scmp.ne.s32.totalorder %s206, %s220
      %p222 = scmp.eq.s32.totalorder %s23, 0
      %p223 = por %p221, %p222
      %s225 = sadd.s32 %s224, 1
      %p228 = scmp.eq.s32.totalorder %s17, 1
      %p229 = scmp.ne.s32.totalorder %s224, %s226
      %p230 = scmp.eq.s32.totalorder %s17, 0
      %p231 = por %p229, %p230
      %p232 = scmp.ne.s32.totalorder %s224, %s226
      %p233 = scmp.eq.s32.totalorder %s22, 1
      %p234 = por %p232, %p233
      %p235 = scmp.ne.s32.totalorder %s226, %s227
      %p236 = scmp.eq.s32.totalorder %s22, 0
      %p237 = por %p235, %p236
      %p238 = scmp.ne.s32.totalorder %s226, %s227
      %p239 = scmp.eq.s32.totalorder %s23, 1
      %p240 = por %p238, %p239
      %p242 = scmp.ne.s32.totalorder %s227, %s241
      %p243 = scmp.eq.s32.totalorder %s23, 0
      %p244 = por %p242, %p243
      %s246 = sadd.s32 %s245, 1
      %p249 = scmp.eq.s32.totalorder %s17, 1
      %p250 = scmp.ne.s32.totalorder %s245, %s247
      %p251 = scmp.eq.s32.totalorder %s17, 0
      %p252 = por %p250, %p251
      %p253 = scmp.ne.s32.totalorder %s245, %s247
      %p254 = scmp.eq.s32.totalorder %s22, 1
      %p255 = por %p253, %p254
      %p256 = scmp.ne.s32.totalorder %s247, %s248
      %p257 = scmp.eq.s32.totalorder %s22, 0
      %p258 = por %p256, %p257
      %p259 = scmp.ne.s32.totalorder %s247, %s248
      %p260 = scmp.eq.s32.totalorder %s23, 1
      %p261 = por %p259, %p260
      %p263 = scmp.ne.s32.totalorder %s248, %s262
      %p264 = scmp.eq.s32.totalorder %s23, 0
      %p265 = por %p263, %p264
      %s266 = ssub.s32 %s17, %s24
      %p267 = scmp.eq.s32.totalorder %s266, 0
      %s269 = sadd.s32 %s268, 1
      %s270 = scalar_select %p267, %s268, %s269
      %p273 = pneg %p267
      %p274 = scmp.eq.s32.totalorder %s17, 1
      %p275 = por %p273, %p274
      %p276 = scmp.ne.s32.totalorder %s268, %s271
      %p277 = scmp.eq.s32.totalorder %s17, 0
      %p278 = por %p276, %p277
      %p279 = scmp.ne.s32.totalorder %s268, %s271
      %p280 = scmp.eq.s32.totalorder %s22, 1
      %p281 = por %p279, %p280
      %p282 = scmp.ne.s32.totalorder %s271, %s272
      %p283 = scmp.eq.s32.totalorder %s22, 0
      %p284 = por %p282, %p283
      %p285 = scmp.ne.s32.totalorder %s271, %s272
      %p286 = scmp.eq.s32.totalorder %s23, 1
      %p287 = por %p285, %p286
      %p289 = scmp.ne.s32.totalorder %s272, %s288
      %p290 = scmp.eq.s32.totalorder %s23, 0
      %p291 = por %p289, %p290
      %p292 = scmp.le.s32.totalorder 1, %s17
      %p293 = scmp.lt.s32.totalorder %s17, 3
      %p294 = pnand %p292, %p293
      %p295 = pneg %p294
      // Predicated region
      $region9: #{bert_bilstm_encoder_forward.1} parent=5 // pred_check
        _
      $region10: #{bert_bilstm_encoder_forward.1} parent=5 // pred_check_branch
        %297 = sbr.rel (%p294) target = $region12
      $region11: #{bert_bilstm_encoder_forward.1} parent=5 // pred_region
        %s298 = ssub.s32 %s17, 1
        // Predicated region
        $region13: #{bert_bilstm_encoder_forward.1} parent=11 // pred_check
          %p299 = pneg %p90
        $region14: #{bert_bilstm_encoder_forward.1} parent=11 // pred_check_branch
          %301 = sbr.rel (%p299) target = $region16
        $region15: #{bert_bilstm_encoder_forward.1} parent=11 // pred_region
          _
        $region16: #{bert_bilstm_encoder_forward.1} parent=11 // pred_fallthru
          _
        // Predicated region
        $region17: #{bert_bilstm_encoder_forward.1} parent=11 // pred_check
          %p302 = pneg %p111
        $region18: #{bert_bilstm_encoder_forward.1} parent=11 // pred_check_branch
          %304 = sbr.rel (%p302) target = $region20
        $region19: #{bert_bilstm_encoder_forward.1} parent=11 // pred_region
          _
        $region20: #{bert_bilstm_encoder_forward.1} parent=11 // pred_fallthru
          _
        // Predicated region
        $region21: #{bert_bilstm_encoder_forward.1} parent=11 // pred_check
          %p305 = pneg %p132
        $region22: #{bert_bilstm_encoder_forward.1} parent=11 // pred_check_branch
          %307 = sbr.rel (%p305) target = $region24
        $region23: #{bert_bilstm_encoder_forward.1} parent=11 // pred_region
          _
        $region24: #{bert_bilstm_encoder_forward.1} parent=11 // pred_fallthru
          _
        // Predicated region
        $region25: #{bert_bilstm_encoder_forward.1} parent=11 // pred_check
          %p308 = pneg %p153
        $region26: #{bert_bilstm_encoder_forward.1} parent=11 // pred_check_branch
          %310 = sbr.rel (%p308) target = $region28
        $region27: #{bert_bilstm_encoder_forward.1} parent=11 // pred_region
          _
        $region28: #{bert_bilstm_encoder_forward.1} parent=11 // pred_fallthru
          _
        // Predicated region
        $region29: #{bert_bilstm_encoder_forward.1} parent=11 // pred_check
          %p311 = pneg %p174
        $region30: #{bert_bilstm_encoder_forward.1} parent=11 // pred_check_branch
          %313 = sbr.rel (%p311) target = $region32
        $region31: #{bert_bilstm_encoder_forward.1} parent=11 // pred_region
          _
        $region32: #{bert_bilstm_encoder_forward.1} parent=11 // pred_fallthru
          _
        // Predicated region
        $region33: #{bert_bilstm_encoder_forward.1} parent=11 // pred_check
          %p314 = pneg %p195
        $region34: #{bert_bilstm_encoder_forward.1} parent=11 // pred_check_branch
          %316 = sbr.rel (%p314) target = $region36
        $region35: #{bert_bilstm_encoder_forward.1} parent=11 // pred_region
          _
        $region36: #{bert_bilstm_encoder_forward.1} parent=11 // pred_fallthru
          _
        // Predicated region
        $region37: #{bert_bilstm_encoder_forward.1} parent=11 // pred_check
          %p317 = pneg %p216
        $region38: #{bert_bilstm_encoder_forward.1} parent=11 // pred_check_branch
          %319 = sbr.rel (%p317) target = $region40
        $region39: #{bert_bilstm_encoder_forward.1} parent=11 // pred_region
          _
        $region40: #{bert_bilstm_encoder_forward.1} parent=11 // pred_fallthru
          _
        // Predicated region
        $region41: #{bert_bilstm_encoder_forward.1} parent=11 // pred_check
          %p320 = pneg %p237
        $region42: #{bert_bilstm_encoder_forward.1} parent=11 // pred_check_branch
          %322 = sbr.rel (%p320) target = $region44
        $region43: #{bert_bilstm_encoder_forward.1} parent=11 // pred_region
          _
        $region44: #{bert_bilstm_encoder_forward.1} parent=11 // pred_fallthru
          _
        // Predicated region
        $region45: #{bert_bilstm_encoder_forward.1} parent=11 // pred_check
          %p323 = pneg %p258
        $region46: #{bert_bilstm_encoder_forward.1} parent=11 // pred_check_branch
          %325 = sbr.rel (%p323) target = $region48
        $region47: #{bert_bilstm_encoder_forward.1} parent=11 // pred_region
          _
        $region48: #{bert_bilstm_encoder_forward.1} parent=11 // pred_fallthru
          _
      $region12: #{bert_bilstm_encoder_forward.1} parent=5 // pred_fallthru
        _
      %p326 = scmp.lt.s32.totalorder %s17, 2
      // Predicated region
      $region49: #{bert_bilstm_encoder_forward.1} parent=5 // pred_check
        %p327 = pneg %p326
      $region50: #{bert_bilstm_encoder_forward.1} parent=5 // pred_check_branch
        %329 = sbr.rel (%p327) target = $region52
      $region51: #{bert_bilstm_encoder_forward.1} parent=5 // pred_region
        // Predicated region
        $region53: #{bert_bilstm_encoder_forward.1} parent=51 // pred_check
          %p330 = pneg %p37
        $region54: #{bert_bilstm_encoder_forward.1} parent=51 // pred_check_branch
          %332 = sbr.rel (%p330) target = $region56
        $region55: #{bert_bilstm_encoder_forward.1} parent=51 // pred_region
          %s333 = sand.u32 %s27, 1
          %s334 = sand.u32 %s27, 1
          %s335 = smul.addr %s334, 64
          %s336 = scalar_lea.vmem [#allocation6], %s335
          %s337 = smul.addr %s17, 8
          %s338 = scalar_lea.vmem %s0, %s337
          // Predicated region
          $region57: #{bert_bilstm_encoder_forward.1} parent=55 // pred_check
            _
          $region58: #{bert_bilstm_encoder_forward.1} parent=55 // pred_check_branch
            %340 = sbr.rel (0) target = $region60
          $region59: #{bert_bilstm_encoder_forward.1} parent=55 // pred_region
            // Predicated region
            $region61: #{bert_bilstm_encoder_forward.1} parent=59 // pred_check
              _
            $region62: #{bert_bilstm_encoder_forward.1} parent=59 // pred_check_branch
              %342 = sbr.rel (0) target = $region64
            $region63: #{bert_bilstm_encoder_forward.1} parent=59 // pred_region
              // Predicated region
              $region76: #{bert_bilstm_encoder_forward.1} parent=63 // pred_check
                _
              $region77: #{bert_bilstm_encoder_forward.1} parent=63 // pred_check_branch
                %371 = sbr.rel (0) target = $region79
              $region78: #{bert_bilstm_encoder_forward.1} parent=63 // pred_region
                loop: start=0, step=1, limit=1
                $region80: #{bert_bilstm_encoder_forward.1} parent=78 // loop_pre_header
                  _
                $region81: #{bert_bilstm_encoder_forward.1} parent=78 // loop_header
                  %s373 = sphi 0, %s377
                  %p374 = scmp.ge.s32.totalorder %s373, 1
                  %s378 = sphi %s338, %s338
                  %s379 = sphi %s336, %s336
                $region82: #{bert_bilstm_encoder_forward.1} parent=78 // loop_header_branch
                  %376 = sbr.rel (%p374) target = $region86
                $region83: #{bert_bilstm_encoder_forward.1} parent=78 // loop_body
                  %v380 = vld [vmem:[%s378] sm:$0xff]
                  %381 = vst [vmem:[%s379] sm:$0xff] %v380
                  %v382 = vld [vmem:[%s378 + $0x10] sm:$0xff]
                  %383 = vst [vmem:[%s379 + $0x8] sm:$0xff] %v382
                  %v384 = vld [vmem:[%s378 + $0x20] sm:$0xff]
                  %385 = vst [vmem:[%s379 + $0x10] sm:$0xff] %v384
                  %v386 = vld [vmem:[%s378 + $0x30] sm:$0xff]
                  %387 = vst [vmem:[%s379 + $0x18] sm:$0xff] %v386
                  %v388 = vld [vmem:[%s378 + $0x40] sm:$0xff]
                  %389 = vst [vmem:[%s379 + $0x20] sm:$0xff] %v388
                  %v390 = vld [vmem:[%s378 + $0x50] sm:$0xff]
                  %391 = vst [vmem:[%s379 + $0x28] sm:$0xff] %v390
                  %v392 = vld [vmem:[%s378 + $0x60] sm:$0xff]
                  %393 = vst [vmem:[%s379 + $0x30] sm:$0xff] %v392
                  %v394 = vld [vmem:[%s378 + $0x70] sm:$0xff]
                  %395 = vst [vmem:[%s379 + $0x38] sm:$0xff] %v394
                $region84: #{bert_bilstm_encoder_forward.1} parent=78 // loop_footer
                  %s377 = sadd.s32 1, %s373
                $region85: #{bert_bilstm_encoder_forward.1} parent=78 // loop_footer_branch
                  %372 = sbr.rel target = $region81
                $region86: #{bert_bilstm_encoder_forward.1} parent=78 // loop_exit
                  _
              $region79: #{bert_bilstm_encoder_forward.1} parent=63 // pred_fallthru
                _
              // Predicated region
              $region87: #{bert_bilstm_encoder_forward.1} parent=63 // pred_check
                _
              $region88: #{bert_bilstm_encoder_forward.1} parent=63 // pred_check_branch
                %397 = sbr.rel target = $region90
              $region89: #{bert_bilstm_encoder_forward.1} parent=63 // pred_region
                _
              $region90: #{bert_bilstm_encoder_forward.1} parent=63 // pred_fallthru
                _
            $region64: #{bert_bilstm_encoder_forward.1} parent=59 // pred_fallthru
              _
            // Predicated region
            $region65: #{bert_bilstm_encoder_forward.1} parent=59 // pred_check
              _
            $region66: #{bert_bilstm_encoder_forward.1} parent=59 // pred_check_branch
              %344 = sbr.rel target = $region68
            $region67: #{bert_bilstm_encoder_forward.1} parent=59 // pred_region
              loop: start=0, step=1, limit=1
              $region69: #{bert_bilstm_encoder_forward.1} parent=67 // loop_pre_header
                _
              $region70: #{bert_bilstm_encoder_forward.1} parent=67 // loop_header
                %s347 = sphi 0, %s351
                %p348 = scmp.ge.s32.totalorder %s347, 1
                %s352 = sphi %s338, %s338
                %s353 = sphi %s336, %s336
              $region71: #{bert_bilstm_encoder_forward.1} parent=67 // loop_header_branch
                %350 = sbr.rel (%p348) target = $region75
              $region72: #{bert_bilstm_encoder_forward.1} parent=67 // loop_body
                %v354 = vld [vmem:[%s352] sm:$0xff]
                %355 = vst [vmem:[%s353] sm:$0xff] %v354
                %v356 = vld [vmem:[%s352 + $0x10] sm:$0xff]
                %357 = vst [vmem:[%s353 + $0x8] sm:$0xff] %v356
                %v358 = vld [vmem:[%s352 + $0x20] sm:$0xff]
                %359 = vst [vmem:[%s353 + $0x10] sm:$0xff] %v358
                %v360 = vld [vmem:[%s352 + $0x30] sm:$0xff]
                %361 = vst [vmem:[%s353 + $0x18] sm:$0xff] %v360
                %v362 = vld [vmem:[%s352 + $0x40] sm:$0xff]
                %363 = vst [vmem:[%s353 + $0x20] sm:$0xff] %v362
                %v364 = vld [vmem:[%s352 + $0x50] sm:$0xff]
                %365 = vst [vmem:[%s353 + $0x28] sm:$0xff] %v364
                %v366 = vld [vmem:[%s352 + $0x60] sm:$0xff]
                %367 = vst [vmem:[%s353 + $0x30] sm:$0xff] %v366
                %v368 = vld [vmem:[%s352 + $0x70] sm:$0xff]
                %369 = vst [vmem:[%s353 + $0x38] sm:$0xff] %v368
              $region73: #{bert_bilstm_encoder_forward.1} parent=67 // loop_footer
                %s351 = sadd.s32 1, %s347
              $region74: #{bert_bilstm_encoder_forward.1} parent=67 // loop_footer_branch
                %346 = sbr.rel target = $region70
              $region75: #{bert_bilstm_encoder_forward.1} parent=67 // loop_exit
                _
            $region68: #{bert_bilstm_encoder_forward.1} parent=59 // pred_fallthru
              _
          $region60: #{bert_bilstm_encoder_forward.1} parent=55 // pred_fallthru
            _
          %398 = vnop
        $region56: #{bert_bilstm_encoder_forward.1} parent=51 // pred_fallthru
          _
        // Predicated region
        $region91: #{bert_bilstm_encoder_forward.1} parent=51 // pred_check
          %p399 = pneg %p63
        $region92: #{bert_bilstm_encoder_forward.1} parent=51 // pred_check_branch
          %401 = sbr.rel (%p399) target = $region94
        $region93: #{bert_bilstm_encoder_forward.1} parent=51 // pred_region
          %s402 = sand.u32 %s53, 1
          %s403 = sand.u32 %s53, 1
          %s404 = smul.addr %s403, 64
          %s405 = scalar_lea.vmem [#allocation7], %s404
          %s406 = smul.addr %s17, 8
          %s407 = scalar_lea.vmem %s1, %s406
          // Predicated region
          $region95: #{bert_bilstm_encoder_forward.1} parent=93 // pred_check
            _
          $region96: #{bert_bilstm_encoder_forward.1} parent=93 // pred_check_branch
            %409 = sbr.rel (0) target = $region98
          $region97: #{bert_bilstm_encoder_forward.1} parent=93 // pred_region
            // Predicated region
            $region99: #{bert_bilstm_encoder_forward.1} parent=97 // pred_check
              _
            $region100: #{bert_bilstm_encoder_forward.1} parent=97 // pred_check_branch
              %411 = sbr.rel (0) target = $region102
            $region101: #{bert_bilstm_encoder_forward.1} parent=97 // pred_region
              // Predicated region
              $region114: #{bert_bilstm_encoder_forward.1} parent=101 // pred_check
                _
              $region115: #{bert_bilstm_encoder_forward.1} parent=101 // pred_check_branch
                %440 = sbr.rel (0) target = $region117
              $region116: #{bert_bilstm_encoder_forward.1} parent=101 // pred_region
                loop: start=0, step=1, limit=1
                $region118: #{bert_bilstm_encoder_forward.1} parent=116 // loop_pre_header
                  _
                $region119: #{bert_bilstm_encoder_forward.1} parent=116 // loop_header
                  %s442 = sphi 0, %s446
                  %p443 = scmp.ge.s32.totalorder %s442, 1
                  %s447 = sphi %s407, %s407
                  %s448 = sphi %s405, %s405
                $region120: #{bert_bilstm_encoder_forward.1} parent=116 // loop_header_branch
                  %445 = sbr.rel (%p443) target = $region124
                $region121: #{bert_bilstm_encoder_forward.1} parent=116 // loop_body
                  %v449 = vld [vmem:[%s447] sm:$0xff]
                  %450 = vst [vmem:[%s448] sm:$0xff] %v449
                  %v451 = vld [vmem:[%s447 + $0x10] sm:$0xff]
                  %452 = vst [vmem:[%s448 + $0x8] sm:$0xff] %v451
                  %v453 = vld [vmem:[%s447 + $0x20] sm:$0xff]
                  %454 = vst [vmem:[%s448 + $0x10] sm:$0xff] %v453
                  %v455 = vld [vmem:[%s447 + $0x30] sm:$0xff]
                  %456 = vst [vmem:[%s448 + $0x18] sm:$0xff] %v455
                  %v457 = vld [vmem:[%s447 + $0x40] sm:$0xff]
                  %458 = vst [vmem:[%s448 + $0x20] sm:$0xff] %v457
                  %v459 = vld [vmem:[%s447 + $0x50] sm:$0xff]
                  %460 = vst [vmem:[%s448 + $0x28] sm:$0xff] %v459
                  %v461 = vld [vmem:[%s447 + $0x60] sm:$0xff]
                  %462 = vst [vmem:[%s448 + $0x30] sm:$0xff] %v461
                  %v463 = vld [vmem:[%s447 + $0x70] sm:$0xff]
                  %464 = vst [vmem:[%s448 + $0x38] sm:$0xff] %v463
                $region122: #{bert_bilstm_encoder_forward.1} parent=116 // loop_footer
                  %s446 = sadd.s32 1, %s442
                $region123: #{bert_bilstm_encoder_forward.1} parent=116 // loop_footer_branch
                  %441 = sbr.rel target = $region119
                $region124: #{bert_bilstm_encoder_forward.1} parent=116 // loop_exit
                  _
              $region117: #{bert_bilstm_encoder_forward.1} parent=101 // pred_fallthru
                _
              // Predicated region
              $region125: #{bert_bilstm_encoder_forward.1} parent=101 // pred_check
                _
              $region126: #{bert_bilstm_encoder_forward.1} parent=101 // pred_check_branch
                %466 = sbr.rel target = $region128
              $region127: #{bert_bilstm_encoder_forward.1} parent=101 // pred_region
                _
              $region128: #{bert_bilstm_encoder_forward.1} parent=101 // pred_fallthru
                _
            $region102: #{bert_bilstm_encoder_forward.1} parent=97 // pred_fallthru
              _
            // Predicated region
            $region103: #{bert_bilstm_encoder_forward.1} parent=97 // pred_check
              _
            $region104: #{bert_bilstm_encoder_forward.1} parent=97 // pred_check_branch
              %413 = sbr.rel target = $region106
            $region105: #{bert_bilstm_encoder_forward.1} parent=97 // pred_region
              loop: start=0, step=1, limit=1
              $region107: #{bert_bilstm_encoder_forward.1} parent=105 // loop_pre_header
                _
              $region108: #{bert_bilstm_encoder_forward.1} parent=105 // loop_header
                %s416 = sphi 0, %s420
                %p417 = scmp.ge.s32.totalorder %s416, 1
                %s421 = sphi %s407, %s407
                %s422 = sphi %s405, %s405
              $region109: #{bert_bilstm_encoder_forward.1} parent=105 // loop_header_branch
                %419 = sbr.rel (%p417) target = $region113
              $region110: #{bert_bilstm_encoder_forward.1} parent=105 // loop_body
                %v423 = vld [vmem:[%s421] sm:$0xff]
                %424 = vst [vmem:[%s422] sm:$0xff] %v423
                %v425 = vld [vmem:[%s421 + $0x10] sm:$0xff]
                %426 = vst [vmem:[%s422 + $0x8] sm:$0xff] %v425
                %v427 = vld [vmem:[%s421 + $0x20] sm:$0xff]
                %428 = vst [vmem:[%s422 + $0x10] sm:$0xff] %v427
                %v429 = vld [vmem:[%s421 + $0x30] sm:$0xff]
                %430 = vst [vmem:[%s422 + $0x18] sm:$0xff] %v429
                %v431 = vld [vmem:[%s421 + $0x40] sm:$0xff]
                %432 = vst [vmem:[%s422 + $0x20] sm:$0xff] %v431
                %v433 = vld [vmem:[%s421 + $0x50] sm:$0xff]
                %434 = vst [vmem:[%s422 + $0x28] sm:$0xff] %v433
                %v435 = vld [vmem:[%s421 + $0x60] sm:$0xff]
                %436 = vst [vmem:[%s422 + $0x30] sm:$0xff] %v435
                %v437 = vld [vmem:[%s421 + $0x70] sm:$0xff]
                %438 = vst [vmem:[%s422 + $0x38] sm:$0xff] %v437
              $region111: #{bert_bilstm_encoder_forward.1} parent=105 // loop_footer
                %s420 = sadd.s32 1, %s416
              $region112: #{bert_bilstm_encoder_forward.1} parent=105 // loop_footer_branch
                %415 = sbr.rel target = $region108
              $region113: #{bert_bilstm_encoder_forward.1} parent=105 // loop_exit
                _
            $region106: #{bert_bilstm_encoder_forward.1} parent=97 // pred_fallthru
              _
          $region98: #{bert_bilstm_encoder_forward.1} parent=93 // pred_fallthru
            _
          %467 = vnop
        $region94: #{bert_bilstm_encoder_forward.1} parent=51 // pred_fallthru
          _
      $region52: #{bert_bilstm_encoder_forward.1} parent=5 // pred_fallthru
        _
      %p468 = scmp.le.s32.totalorder 1, %s17
      %p469 = scmp.lt.s32.totalorder %s17, 3
      %p470 = pnand %p468, %p469
      %p471 = pneg %p470
      // Predicated region
      $region129: #{bert_bilstm_encoder_forward.1} parent=5 // pred_check
        _
      $region130: #{bert_bilstm_encoder_forward.1} parent=5 // pred_check_branch
        %473 = sbr.rel (%p470) target = $region132
      $region131: #{bert_bilstm_encoder_forward.1} parent=5 // pred_region
        %s474 = ssub.s32 %s17, 1
        %s475 = sand.u32 %s30, 1
        %s476 = sand.u32 %s30, 1
        %s477 = smul.addr %s476, 64
        %s478 = scalar_lea.vmem [#allocation6], %s477
        // Predicated region
        $region133: #{bert_bilstm_encoder_forward.1} parent=131 // pred_check
          %p479 = pneg %p43
        $region134: #{bert_bilstm_encoder_forward.1} parent=131 // pred_check_branch
          %481 = sbr.rel (%p479) target = $region136
        $region135: #{bert_bilstm_encoder_forward.1} parent=131 // pred_region
          _
        $region136: #{bert_bilstm_encoder_forward.1} parent=131 // pred_fallthru
          _
        %s482 = sand.u32 %s56, 1
        %s483 = sand.u32 %s56, 1
        %s484 = smul.addr %s483, 64
        %s485 = scalar_lea.vmem [#allocation7], %s484
        // Predicated region
        $region137: #{bert_bilstm_encoder_forward.1} parent=131 // pred_check
          %p486 = pneg %p69
        $region138: #{bert_bilstm_encoder_forward.1} parent=131 // pred_check_branch
          %488 = sbr.rel (%p486) target = $region140
        $region139: #{bert_bilstm_encoder_forward.1} parent=131 // pred_region
          _
        $region140: #{bert_bilstm_encoder_forward.1} parent=131 // pred_fallthru
          _
        %s489 = sand.u32 %s30, 1
        %s490 = sand.u32 %s30, 1
        %s491 = smul.addr %s490, 64
        %s492 = scalar_lea.vmem [#allocation6], %s491
        %p493 = pneg %p43
        %p494 = pneg %p40
        %s495 = sand.u32 %s56, 1
        %s496 = sand.u32 %s56, 1
        %s497 = smul.addr %s496, 64
        %s498 = scalar_lea.vmem [#allocation7], %s497
        %p499 = pneg %p69
        %p500 = pneg %p66
        %p501 = pneg %p90
        %p502 = pneg %p87
        %p503 = pneg %p111
        %p504 = pneg %p108
        %p505 = pneg %p132
        %p506 = pneg %p129
        %p507 = pneg %p153
        %p508 = pneg %p150
        %p509 = pneg %p174
        %p510 = pneg %p171
        %p511 = pneg %p195
        %p512 = pneg %p192
        %p513 = pneg %p216
        %p514 = pneg %p213
        %p515 = pneg %p237
        %p516 = pneg %p234
        %p517 = pneg %p258
        %p518 = pneg %p255
        %p519 = pneg %p284
        %p520 = pneg %p281
        %s521 = sand.u32 %s271, 1
        %s522 = sand.u32 %s271, 1
        %s523 = smul.addr %s522, 64
        %s524 = scalar_lea.vmem [#allocation8], %s523
        %v525 = vld [vmem:[%s478] sm:$0xff]
        %v526 = vld [vmem:[%s478 + $0x8] sm:$0xff]
        %v527 = vld [vmem:[%s478 + $0x10] sm:$0xff]
        %v528 = vld [vmem:[%s478 + $0x18] sm:$0xff]
        %v529 = vld [vmem:[%s478 + $0x20] sm:$0xff]
        %v530 = vld [vmem:[%s478 + $0x28] sm:$0xff]
        %v531 = vld [vmem:[%s478 + $0x30] sm:$0xff]
        %v532 = vld [vmem:[%s478 + $0x38] sm:$0xff]
        %v533 = vld [vmem:[%s485] sm:$0xff]
        %v534 = vld [vmem:[%s485 + $0x8] sm:$0xff]
        %v535 = vld [vmem:[%s485 + $0x10] sm:$0xff]
        %v536 = vld [vmem:[%s485 + $0x18] sm:$0xff]
        %v537 = vld [vmem:[%s485 + $0x20] sm:$0xff]
        %v538 = vld [vmem:[%s485 + $0x28] sm:$0xff]
        %v539 = vld [vmem:[%s485 + $0x30] sm:$0xff]
        %v540 = vld [vmem:[%s485 + $0x38] sm:$0xff]
        %v541 = vld [vmem:[%s2] sm:$0xff]
        %v542 = vld [vmem:[%s2 + $0x8] sm:$0xff]
        %v543 = vld [vmem:[%s2 + $0x10] sm:$0xff]
        %v544 = vld [vmem:[%s2 + $0x18] sm:$0xff]
        %v545 = vld [vmem:[%s2 + $0x20] sm:$0xff]
        %v546 = vld [vmem:[%s2 + $0x28] sm:$0xff]
        %v547 = vld [vmem:[%s2 + $0x30] sm:$0xff]
        %v548 = vld [vmem:[%s2 + $0x38] sm:$0xff]
        %v549 = vld [vmem:[%s2 + $0x40] sm:$0xff]
        %v550 = vld [vmem:[%s2 + $0x48] sm:$0xff]
        %v551 = vld [vmem:[%s2 + $0x50] sm:$0xff]
        %v552 = vld [vmem:[%s2 + $0x58] sm:$0xff]
        %v553 = vld [vmem:[%s2 + $0x60] sm:$0xff]
        %v554 = vld [vmem:[%s2 + $0x68] sm:$0xff]
        %v555 = vld [vmem:[%s2 + $0x70] sm:$0xff]
        %v556 = vld [vmem:[%s2 + $0x78] sm:$0xff]
        %v557 = vld [vmem:[%s4] sm:$0x1]
        %v559 = vlaneseq
        %v560 = vshrl.u32 %v559, 7
        %v561 = vsub.s32 0, %v560
        %v562 = vrot.slane %v557, %v561
        %564 = vmatprep.subr.mxu0 0.0
        %565 = vmatpush1.msra.mxu0 %v541
        %566 = vmatprep.subr.mxu0 0.0
        %567 = vmatpush1.msra.mxu0 %v542
        %568 = vmatprep.subr.mxu0 0.0
        %569 = vmatpush1.msra.mxu0 %v543
        %570 = vmatprep.subr.mxu0 0.0
        %571 = vmatpush1.msra.mxu0 %v544
        %572 = vmatprep.subr.mxu0 0.0
        %573 = vmatpush1.msra.mxu0 %v545
        %574 = vmatprep.subr.mxu0 0.0
        %575 = vmatpush1.msra.mxu0 %v546
        %576 = vmatprep.subr.mxu0 0.0
        %577 = vmatpush1.msra.mxu0 %v547
        %578 = vmatprep.subr.mxu0 0.0
        %579 = vmatpush1.msra.mxu0 %v548
        %580 = vmatprep.subr.mxu0 0.0
        %581 = vmatpush1.msra.mxu0 %v549
        %582 = vmatprep.subr.mxu0 0.0
        %583 = vmatpush1.msra.mxu0 %v550
        %584 = vmatprep.subr.mxu0 0.0
        %585 = vmatpush1.msra.mxu0 %v551
        %586 = vmatprep.subr.mxu0 0.0
        %587 = vmatpush1.msra.mxu0 %v552
        %588 = vmatprep.subr.mxu0 0.0
        %589 = vmatpush1.msra.mxu0 %v553
        %590 = vmatprep.subr.mxu0 0.0
        %591 = vmatpush1.msra.mxu0 %v554
        %592 = vmatprep.subr.mxu0 0.0
        %593 = vmatpush1.msra.mxu0 %v555
        %594 = vmatprep.subr.mxu0 0.0
        %595 = vmatpush1.msra.mxu0 %v556
        %596 = vmatprep.subr.mxu0 0.0
        %597 = vmatpush1.msra.mxu0 0.0
        %598 = vmatprep.subr.mxu0 0.0
        %599 = vmatpush1.msra.mxu0 0.0
        %600 = vmatprep.subr.mxu0 0.0
        %601 = vmatpush1.msra.mxu0 0.0
        %602 = vmatprep.subr.mxu0 0.0
        %603 = vmatpush1.msra.mxu0 0.0
        %604 = vmatprep.subr.mxu0 0.0
        %605 = vmatpush1.msra.mxu0 0.0
        %606 = vmatprep.subr.mxu0 0.0
        %607 = vmatpush1.msra.mxu0 0.0
        %608 = vmatprep.subr.mxu0 0.0
        %609 = vmatpush1.msra.mxu0 0.0
        %610 = vmatprep.subr.mxu0 0.0
        %611 = vmatpush1.msra.mxu0 0.0
        %612 = vmatprep.subr.mxu0 0.0
        %613 = vmatpush1.msra.mxu0 0.0
        %614 = vmatprep.subr.mxu0 0.0
        %615 = vmatpush1.msra.mxu0 0.0
        %616 = vmatprep.subr.mxu0 0.0
        %617 = vmatpush1.msra.mxu0 0.0
        %618 = vmatprep.subr.mxu0 0.0
        %619 = vmatpush1.msra.mxu0 0.0
        %620 = vmatprep.subr.mxu0 0.0
        %621 = vmatpush1.msra.mxu0 0.0
        %622 = vmatprep.subr.mxu0 0.0
        %623 = vmatpush1.msra.mxu0 0.0
        %624 = vmatprep.subr.mxu0 0.0
        %625 = vmatpush1.msra.mxu0 0.0
        %626 = vmatprep.subr.mxu0 0.0
        %627 = vmatpush1.msra.mxu0 0.0
        %628 = vmatprep.mubr.f32.mxu0 0.0
        %629 = vmatmul.mubr.f32.gmra.mrb[0].mxu0 %v525
        %v630 = vpop.f32.mrb[0].mxu0
        %v631 = vadd.f32 %v562, %v630
        %v632 = vpop.f32.mrb[0].mxu0
        %633 = vmatprep.mubr.f32.mxu0 0.0
        %634 = vmatmul.mubr.f32.gmra.mrb[0].mxu0 %v526
        %v635 = vpop.f32.mrb[0].mxu0
        %v636 = vadd.f32 %v562, %v635
        %v637 = vpop.f32.mrb[0].mxu0
        %638 = vmatprep.mubr.f32.mxu0 0.0
        %639 = vmatmul.mubr.f32.gmra.mrb[0].mxu0 %v527
        %v640 = vpop.f32.mrb[0].mxu0
        %v641 = vadd.f32 %v562, %v640
        %v642 = vpop.f32.mrb[0].mxu0
        %643 = vmatprep.mubr.f32.mxu0 0.0
        %644 = vmatmul.mubr.f32.gmra.mrb[0].mxu0 %v528
        %v645 = vpop.f32.mrb[0].mxu0
        %v646 = vadd.f32 %v562, %v645
        %v647 = vpop.f32.mrb[0].mxu0
        %648 = vmatprep.mubr.f32.mxu0 0.0
        %649 = vmatmul.mubr.f32.gmra.mrb[0].mxu0 %v529
        %v650 = vpop.f32.mrb[0].mxu0
        %v651 = vadd.f32 %v562, %v650
        %v652 = vpop.f32.mrb[0].mxu0
        %653 = vmatprep.mubr.f32.mxu0 0.0
        %654 = vmatmul.mubr.f32.gmra.mrb[0].mxu0 %v530
        %v655 = vpop.f32.mrb[0].mxu0
        %v656 = vadd.f32 %v562, %v655
        %v657 = vpop.f32.mrb[0].mxu0
        %658 = vmatprep.mubr.f32.mxu0 0.0
        %659 = vmatmul.mubr.f32.gmra.mrb[0].mxu0 %v531
        %v660 = vpop.f32.mrb[0].mxu0
        %v661 = vadd.f32 %v562, %v660
        %v662 = vpop.f32.mrb[0].mxu0
        %663 = vmatprep.mubr.f32.mxu0 0.0
        %664 = vmatmul.mubr.f32.gmra.mrb[0].mxu0 %v532
        %v665 = vpop.f32.mrb[0].mxu0
        %v666 = vadd.f32 %v562, %v665
        %v667 = vpop.f32.mrb[0].mxu0
        %668 = vdwg.mxu0
        %669 = vst [vmem:[#allocation2] sm:$0xff] %v631
        %670 = vst [vmem:[#allocation2 + $0x8] sm:$0xff] %v636
        %671 = vst [vmem:[#allocation2 + $0x10] sm:$0xff] %v641
        %672 = vst [vmem:[#allocation2 + $0x18] sm:$0xff] %v646
        %673 = vst [vmem:[#allocation2 + $0x20] sm:$0xff] %v651
        %674 = vst [vmem:[#allocation2 + $0x28] sm:$0xff] %v656
        %675 = vst [vmem:[#allocation2 + $0x30] sm:$0xff] %v661
        %676 = vst [vmem:[#allocation2 + $0x38] sm:$0xff] %v666
        %v677 = vld [vmem:[%s5] sm:$0xff]
        %v678 = vld [vmem:[%s5 + $0x8] sm:$0xff]
        %v679 = vld [vmem:[%s5 + $0x10] sm:$0xff]
        %v680 = vld [vmem:[%s5 + $0x18] sm:$0xff]
        %v681 = vld [vmem:[%s5 + $0x20] sm:$0xff]
        %v682 = vld [vmem:[%s5 + $0x28] sm:$0xff]
        %v683 = vld [vmem:[%s5 + $0x30] sm:$0xff]
        %v684 = vld [vmem:[%s5 + $0x38] sm:$0xff]
        %v685 = vld [vmem:[%s5 + $0x40] sm:$0xff]
        %v686 = vld [vmem:[%s5 + $0x48] sm:$0xff]
        %v687 = vld [vmem:[%s5 + $0x50] sm:$0xff]
        %v688 = vld [vmem:[%s5 + $0x58] sm:$0xff]
        %v689 = vld [vmem:[%s5 + $0x60] sm:$0xff]
        %v690 = vld [vmem:[%s5 + $0x68] sm:$0xff]
        %v691 = vld [vmem:[%s5 + $0x70] sm:$0xff]
        %v692 = vld [vmem:[%s5 + $0x78] sm:$0xff]
        %v693 = vld [vmem:[%s7] sm:$0x1]
        %v695 = vlaneseq
        %v696 = vshrl.u32 %v695, 7
        %v697 = vsub.s32 0, %v696
        %v698 = vrot.slane %v693, %v697
        %700 = vmatprep.subr.mxu0 0.0
        %701 = vmatpush1.msra.mxu0 %v677
        %702 = vmatprep.subr.mxu0 0.0
        %703 = vmatpush1.msra.mxu0 %v678
        %704 = vmatprep.subr.mxu0 0.0
        %705 = vmatpush1.msra.mxu0 %v679
        %706 = vmatprep.subr.mxu0 0.0
        %707 = vmatpush1.msra.mxu0 %v680
        %708 = vmatprep.subr.mxu0 0.0
        %709 = vmatpush1.msra.mxu0 %v681
        %710 = vmatprep.subr.mxu0 0.0
        %711 = vmatpush1.msra.mxu0 %v682
        %712 = vmatprep.subr.mxu0 0.0
        %713 = vmatpush1.msra.mxu0 %v683
        %714 = vmatprep.subr.mxu0 0.0
        %715 = vmatpush1.msra.mxu0 %v684
        %716 = vmatprep.subr.mxu0 0.0
        %717 = vmatpush1.msra.mxu0 %v685
        %718 = vmatprep.subr.mxu0 0.0
        %719 = vmatpush1.msra.mxu0 %v686
        %720 = vmatprep.subr.mxu0 0.0
        %721 = vmatpush1.msra.mxu0 %v687
        %722 = vmatprep.subr.mxu0 0.0
        %723 = vmatpush1.msra.mxu0 %v688
        %724 = vmatprep.subr.mxu0 0.0
        %725 = vmatpush1.msra.mxu0 %v689
        %726 = vmatprep.subr.mxu0 0.0
        %727 = vmatpush1.msra.mxu0 %v690
        %728 = vmatprep.subr.mxu0 0.0
        %729 = vmatpush1.msra.mxu0 %v691
        %730 = vmatprep.subr.mxu0 0.0
        %731 = vmatpush1.msra.mxu0 %v692
        %732 = vmatprep.subr.mxu0 0.0
        %733 = vmatpush1.msra.mxu0 0.0
        %734 = vmatprep.subr.mxu0 0.0
        %735 = vmatpush1.msra.mxu0 0.0
        %736 = vmatprep.subr.mxu0 0.0
        %737 = vmatpush1.msra.mxu0 0.0
        %738 = vmatprep.subr.mxu0 0.0
        %739 = vmatpush1.msra.mxu0 0.0
        %740 = vmatprep.subr.mxu0 0.0
        %741 = vmatpush1.msra.mxu0 0.0
        %742 = vmatprep.subr.mxu0 0.0
        %743 = vmatpush1.msra.mxu0 0.0
        %744 = vmatprep.subr.mxu0 0.0
        %745 = vmatpush1.msra.mxu0 0.0
        %746 = vmatprep.subr.mxu0 0.0
        %747 = vmatpush1.msra.mxu0 0.0
        %748 = vmatprep.subr.mxu0 0.0
        %749 = vmatpush1.msra.mxu0 0.0
        %750 = vmatprep.subr.mxu0 0.0
        %751 = vmatpush1.msra.mxu0 0.0
        %752 = vmatprep.subr.mxu0 0.0
        %753 = vmatpush1.msra.mxu0 0.0
        %754 = vmatprep.subr.mxu0 0.0
        %755 = vmatpush1.msra.mxu0 0.0
        %756 = vmatprep.subr.mxu0 0.0
        %757 = vmatpush1.msra.mxu0 0.0
        %758 = vmatprep.subr.mxu0 0.0
        %759 = vmatpush1.msra.mxu0 0.0
        %760 = vmatprep.subr.mxu0 0.0
        %761 = vmatpush1.msra.mxu0 0.0
        %762 = vmatprep.subr.mxu0 0.0
        %763 = vmatpush1.msra.mxu0 0.0
        %764 = vmatprep.mubr.f32.mxu0 0.0
        %765 = vmatmul.mubr.f32.gmra.mrb[0].mxu0 %v525
        %v766 = vpop.f32.mrb[0].mxu0
        %v767 = vadd.f32 %v698, %v766
        %v768 = vpop.f32.mrb[0].mxu0
        %769 = vmatprep.mubr.f32.mxu0 0.0
        %770 = vmatmul.mubr.f32.gmra.mrb[0].mxu0 %v526
        %v771 = vpop.f32.mrb[0].mxu0
        %v772 = vadd.f32 %v698, %v771
        %v773 = vpop.f32.mrb[0].mxu0
        %774 = vmatprep.mubr.f32.mxu0 0.0
        %775 = vmatmul.mubr.f32.gmra.mrb[0].mxu0 %v527
        %v776 = vpop.f32.mrb[0].mxu0
        %v777 = vadd.f32 %v698, %v776
        %v778 = vpop.f32.mrb[0].mxu0
        %779 = vmatprep.mubr.f32.mxu0 0.0
        %780 = vmatmul.mubr.f32.gmra.mrb[0].mxu0 %v528
        %v781 = vpop.f32.mrb[0].mxu0
        %v782 = vadd.f32 %v698, %v781
        %v783 = vpop.f32.mrb[0].mxu0
        %784 = vmatprep.mubr.f32.mxu0 0.0
        %785 = vmatmul.mubr.f32.gmra.mrb[0].mxu0 %v529
        %v786 = vpop.f32.mrb[0].mxu0
        %v787 = vadd.f32 %v698, %v786
        %v788 = vpop.f32.mrb[0].mxu0
        %789 = vmatprep.mubr.f32.mxu0 0.0
        %790 = vmatmul.mubr.f32.gmra.mrb[0].mxu0 %v530
        %v791 = vpop.f32.mrb[0].mxu0
        %v792 = vadd.f32 %v698, %v791
        %v793 = vpop.f32.mrb[0].mxu0
        %794 = vmatprep.mubr.f32.mxu0 0.0
        %795 = vmatmul.mubr.f32.gmra.mrb[0].mxu0 %v531
        %v796 = vpop.f32.mrb[0].mxu0
        %v797 = vadd.f32 %v698, %v796
        %v798 = vpop.f32.mrb[0].mxu0
        %799 = vmatprep.mubr.f32.mxu0 0.0
        %800 = vmatmul.mubr.f32.gmra.mrb[0].mxu0 %v532
        %v801 = vpop.f32.mrb[0].mxu0
        %v802 = vadd.f32 %v698, %v801
        %v803 = vpop.f32.mrb[0].mxu0
        %804 = vdwg.mxu0
        %806 = vset.pattern.permute.xlu0 0
        %807 = vperm.xlu0 %806, %v533
        %v808 = vpop.permute.xlu0 %807
        %811 = vset.pattern.permute.xlu0 0
        %812 = vperm.xlu0 %811, %v534
        %v813 = vpop.permute.xlu0 %812
        %816 = vset.pattern.permute.xlu0 0
        %817 = vperm.xlu0 %816, %v535
        %v818 = vpop.permute.xlu0 %817
        %821 = vset.pattern.permute.xlu0 0
        %822 = vperm.xlu0 %821, %v536
        %v823 = vpop.permute.xlu0 %822
        %826 = vset.pattern.permute.xlu0 0
        %827 = vperm.xlu0 %826, %v537
        %v828 = vpop.permute.xlu0 %827
        %831 = vset.pattern.permute.xlu0 0
        %832 = vperm.xlu0 %831, %v538
        %v833 = vpop.permute.xlu0 %832
        %836 = vset.pattern.permute.xlu0 0
        %837 = vperm.xlu0 %836, %v539
        %v838 = vpop.permute.xlu0 %837
        %841 = vset.pattern.permute.xlu0 0
        %842 = vperm.xlu0 %841, %v540
        %v843 = vpop.permute.xlu0 %842
        %v845 = vmul.f32 %v767, %v808
        %v846 = vmul.f32 %v772, %v813
        %v847 = vmul.f32 %v777, %v818
        %v848 = vmul.f32 %v782, %v823
        %v849 = vmul.f32 %v787, %v828
        %v850 = vmul.f32 %v792, %v833
        %v851 = vmul.f32 %v797, %v838
        %v852 = vmul.f32 %v802, %v843
        %853 = vst [vmem:[#allocation3] sm:$0xff] %v845
        %854 = vst [vmem:[#allocation3 + $0x8] sm:$0xff] %v846
        %855 = vst [vmem:[#allocation3 + $0x10] sm:$0xff] %v847
        %856 = vst [vmem:[#allocation3 + $0x18] sm:$0xff] %v848
        %857 = vst [vmem:[#allocation3 + $0x20] sm:$0xff] %v849
        %858 = vst [vmem:[#allocation3 + $0x28] sm:$0xff] %v850
        %859 = vst [vmem:[#allocation3 + $0x30] sm:$0xff] %v851
        %860 = vst [vmem:[#allocation3 + $0x38] sm:$0xff] %v852
        %v861 = vld [vmem:[%s3] sm:$0xff]
        %v862 = vld [vmem:[%s3 + $0x8] sm:$0xff]
        %v863 = vld [vmem:[%s3 + $0x10] sm:$0xff]
        %v864 = vld [vmem:[%s3 + $0x18] sm:$0xff]
        %v865 = vld [vmem:[%s6] sm:$0xff]
        %v866 = vld [vmem:[%s6 + $0x8] sm:$0xff]
        %v867 = vld [vmem:[%s6 + $0x10] sm:$0xff]
        %v868 = vld [vmem:[%s6 + $0x18] sm:$0xff]
        loop: start=0, step=1, limit=8
        $region141: #{bert_bilstm_encoder_forward.1} parent=131 // loop_pre_header
          _
        $region142: #{bert_bilstm_encoder_forward.1} parent=131 // loop_header
          %s870 = sphi 0, %s874
          %p871 = scmp.ge.s32.totalorder %s870, 8
          %v875 = vphi 0.0, %v980
          %v876 = vphi 0.0, %v974
        $region143: #{bert_bilstm_encoder_forward.1} parent=131 // loop_header_branch
          %873 = sbr.rel (%p871) target = $region147
        $region144: #{bert_bilstm_encoder_forward.1} parent=131 // loop_body
          %s877 = smul.u32 %s870, 8
          %s878 = scalar_lea.vmem [#allocation2], %s877
          %v879 = vld [vmem:[%s878] sm:$0xff]
          %881 = vrot.lane.b32.xlu0 %v875, 64
          %v882 = vpop.permute.xlu0 %881
          %vm883 = vcmask 261120
          %v884 = vsel %vm883, %v882, 0
          %886 = vmatprep.subr.mxu0 0.0
          %887 = vmatpush1.msra.mxu0 %v861
          %888 = vmatprep.subr.mxu0 0.0
          %889 = vmatpush1.msra.mxu0 %v862
          %890 = vmatprep.subr.mxu0 0.0
          %891 = vmatpush1.msra.mxu0 %v863
          %892 = vmatprep.subr.mxu0 0.0
          %893 = vmatpush1.msra.mxu0 %v864
          %894 = vmatprep.subr.mxu0 0.0
          %895 = vmatpush1.msra.mxu0 0.0
          %896 = vmatprep.subr.mxu0 0.0
          %897 = vmatpush1.msra.mxu0 0.0
          %898 = vmatprep.subr.mxu0 0.0
          %899 = vmatpush1.msra.mxu0 0.0
          %900 = vmatprep.subr.mxu0 0.0
          %901 = vmatpush1.msra.mxu0 0.0
          %902 = vmatprep.subr.mxu0 0.0
          %903 = vmatpush1.msra.mxu0 0.0
          %904 = vmatprep.subr.mxu0 0.0
          %905 = vmatpush1.msra.mxu0 0.0
          %906 = vmatprep.subr.mxu0 0.0
          %907 = vmatpush1.msra.mxu0 0.0
          %908 = vmatprep.subr.mxu0 0.0
          %909 = vmatpush1.msra.mxu0 0.0
          %910 = vmatprep.subr.mxu0 0.0
          %911 = vmatpush1.msra.mxu0 0.0
          %912 = vmatprep.subr.mxu0 0.0
          %913 = vmatpush1.msra.mxu0 0.0
          %914 = vmatprep.subr.mxu0 0.0
          %915 = vmatpush1.msra.mxu0 0.0
          %916 = vmatprep.subr.mxu0 0.0
          %917 = vmatpush1.msra.mxu0 0.0
          %918 = vmatprep.subr.mxu0 0.0
          %919 = vmatpush1.msra.mxu0 0.0
          %920 = vmatprep.subr.mxu0 0.0
          %921 = vmatpush1.msra.mxu0 0.0
          %922 = vmatprep.subr.mxu0 0.0
          %923 = vmatpush1.msra.mxu0 0.0
          %924 = vmatprep.subr.mxu0 0.0
          %925 = vmatpush1.msra.mxu0 0.0
          %926 = vmatprep.subr.mxu0 0.0
          %927 = vmatpush1.msra.mxu0 0.0
          %928 = vmatprep.subr.mxu0 0.0
          %929 = vmatpush1.msra.mxu0 0.0
          %930 = vmatprep.subr.mxu0 0.0
          %931 = vmatpush1.msra.mxu0 0.0
          %932 = vmatprep.subr.mxu0 0.0
          %933 = vmatpush1.msra.mxu0 0.0
          %934 = vmatprep.subr.mxu0 0.0
          %935 = vmatpush1.msra.mxu0 0.0
          %936 = vmatprep.subr.mxu0 0.0
          %937 = vmatpush1.msra.mxu0 0.0
          %938 = vmatprep.subr.mxu0 0.0
          %939 = vmatpush1.msra.mxu0 0.0
          %940 = vmatprep.subr.mxu0 0.0
          %941 = vmatpush1.msra.mxu0 0.0
          %942 = vmatprep.subr.mxu0 0.0
          %943 = vmatpush1.msra.mxu0 0.0
          %944 = vmatprep.subr.mxu0 0.0
          %945 = vmatpush1.msra.mxu0 0.0
          %946 = vmatprep.subr.mxu0 0.0
          %947 = vmatpush1.msra.mxu0 0.0
          %948 = vmatprep.subr.mxu0 0.0
          %949 = vmatpush1.msra.mxu0 0.0
          %950 = vmatprep.mubr.f32.mxu0 0.0
          %951 = vmatmul.mubr.f32.gmra.mrb[0].mxu0 %v884
          %v952 = vpop.f32.mrb[0].mxu0
          %v953 = vadd.f32 0.0, %v952
          %v954 = vpop.f32.mrb[0].mxu0
          %955 = vdwg.mxu0
          %v956 = vadd.f32 %v879, %v953
          %v957 = vxor.u32 %v956, 2147483648
          %v958 = vmul.f32 %v957, 1.442695
          %v959 = vpow.pop %v958
          %v960 = vadd.f32 %v959, 1.0
          %v961 = vrcp.pop %v960
          %v962 = vmul.f32 1.0, %v961
          %v963 = vtanh.pop %v956
          %v964 = vmul.f32 %v962, %v876
          %966 = vrot.lane.b32.xlu0 %v963, 32
          %v967 = vpop.permute.xlu0 %966
          %v969 = vmul.f32 %v962, %v967
          %971 = vrot.lane.b32.xlu0 %v969, 32
          %v972 = vpop.permute.xlu0 %971
          %v974 = vadd.f32 %v964, %v972
          %v975 = vtanh.pop %v974
          %977 = vrot.lane.b32.xlu0 %v975, 32
          %v978 = vpop.permute.xlu0 %977
          %v980 = vmul.f32 %v962, %v978
          %982 = vrot.lane.b32.xlu0 %v980, 64
          %v983 = vpop.permute.xlu0 %982
          %s985 = scalar_lea.vmem [#allocation4], %s877
          %986 = vst.msk [vmem:[%s985] sm:$0xff] %vm883, %v983
        $region145: #{bert_bilstm_encoder_forward.1} parent=131 // loop_footer
          %s874 = sadd.s32 1, %s870
        $region146: #{bert_bilstm_encoder_forward.1} parent=131 // loop_footer_branch
          %869 = sbr.rel target = $region142
        $region147: #{bert_bilstm_encoder_forward.1} parent=131 // loop_exit
          _
        loop: start=0, step=1, limit=8
        $region148: #{bert_bilstm_encoder_forward.1} parent=131 // loop_pre_header
          _
        $region149: #{bert_bilstm_encoder_forward.1} parent=131 // loop_header
          %s988 = sphi 0, %s992
          %p989 = scmp.ge.s32.totalorder %s988, 8
          %v993 = vphi 0.0, %v1099
          %v994 = vphi 0.0, %v1093
        $region150: #{bert_bilstm_encoder_forward.1} parent=131 // loop_header_branch
          %991 = sbr.rel (%p989) target = $region154
        $region151: #{bert_bilstm_encoder_forward.1} parent=131 // loop_body
          %s995 = ssub.s32 7, %s988
          %s996 = smul.u32 %s995, 8
          %s997 = scalar_lea.vmem [#allocation3], %s996
          %v998 = vld [vmem:[%s997] sm:$0xff]
          %1000 = vrot.lane.b32.xlu0 %v993, 64
          %v1001 = vpop.permute.xlu0 %1000
          %vm1002 = vcmask 261120
          %v1003 = vsel %vm1002, %v1001, 0
          %1005 = vmatprep.subr.mxu0 0.0
          %1006 = vmatpush1.msra.mxu0 %v865
          %1007 = vmatprep.subr.mxu0 0.0
          %1008 = vmatpush1.msra.mxu0 %v866
          %1009 = vmatprep.subr.mxu0 0.0
          %1010 = vmatpush1.msra.mxu0 %v867
          %1011 = vmatprep.subr.mxu0 0.0
          %1012 = vmatpush1.msra.mxu0 %v868
          %1013 = vmatprep.subr.mxu0 0.0
          %1014 = vmatpush1.msra.mxu0 0.0
          %1015 = vmatprep.subr.mxu0 0.0
          %1016 = vmatpush1.msra.mxu0 0.0
          %1017 = vmatprep.subr.mxu0 0.0
          %1018 = vmatpush1.msra.mxu0 0.0
          %1019 = vmatprep.subr.mxu0 0.0
          %1020 = vmatpush1.msra.mxu0 0.0
          %1021 = vmatprep.subr.mxu0 0.0
          %1022 = vmatpush1.msra.mxu0 0.0
          %1023 = vmatprep.subr.mxu0 0.0
          %1024 = vmatpush1.msra.mxu0 0.0
          %1025 = vmatprep.subr.mxu0 0.0
          %1026 = vmatpush1.msra.mxu0 0.0
          %1027 = vmatprep.subr.mxu0 0.0
          %1028 = vmatpush1.msra.mxu0 0.0
          %1029 = vmatprep.subr.mxu0 0.0
          %1030 = vmatpush1.msra.mxu0 0.0
          %1031 = vmatprep.subr.mxu0 0.0
          %1032 = vmatpush1.msra.mxu0 0.0
          %1033 = vmatprep.subr.mxu0 0.0
          %1034 = vmatpush1.msra.mxu0 0.0
          %1035 = vmatprep.subr.mxu0 0.0
          %1036 = vmatpush1.msra.mxu0 0.0
          %1037 = vmatprep.subr.mxu0 0.0
          %1038 = vmatpush1.msra.mxu0 0.0
          %1039 = vmatprep.subr.mxu0 0.0
          %1040 = vmatpush1.msra.mxu0 0.0
          %1041 = vmatprep.subr.mxu0 0.0
          %1042 = vmatpush1.msra.mxu0 0.0
          %1043 = vmatprep.subr.mxu0 0.0
          %1044 = vmatpush1.msra.mxu0 0.0
          %1045 = vmatprep.subr.mxu0 0.0
          %1046 = vmatpush1.msra.mxu0 0.0
          %1047 = vmatprep.subr.mxu0 0.0
          %1048 = vmatpush1.msra.mxu0 0.0
          %1049 = vmatprep.subr.mxu0 0.0
          %1050 = vmatpush1.msra.mxu0 0.0
          %1051 = vmatprep.subr.mxu0 0.0
          %1052 = vmatpush1.msra.mxu0 0.0
          %1053 = vmatprep.subr.mxu0 0.0
          %1054 = vmatpush1.msra.mxu0 0.0
          %1055 = vmatprep.subr.mxu0 0.0
          %1056 = vmatpush1.msra.mxu0 0.0
          %1057 = vmatprep.subr.mxu0 0.0
          %1058 = vmatpush1.msra.mxu0 0.0
          %1059 = vmatprep.subr.mxu0 0.0
          %1060 = vmatpush1.msra.mxu0 0.0
          %1061 = vmatprep.subr.mxu0 0.0
          %1062 = vmatpush1.msra.mxu0 0.0
          %1063 = vmatprep.subr.mxu0 0.0
          %1064 = vmatpush1.msra.mxu0 0.0
          %1065 = vmatprep.subr.mxu0 0.0
          %1066 = vmatpush1.msra.mxu0 0.0
          %1067 = vmatprep.subr.mxu0 0.0
          %1068 = vmatpush1.msra.mxu0 0.0
          %1069 = vmatprep.mubr.f32.mxu0 0.0
          %1070 = vmatmul.mubr.f32.gmra.mrb[0].mxu0 %v1003
          %v1071 = vpop.f32.mrb[0].mxu0
          %v1072 = vadd.f32 0.0, %v1071
          %v1073 = vpop.f32.mrb[0].mxu0
          %1074 = vdwg.mxu0
          %v1075 = vadd.f32 %v998, %v1072
          %v1076 = vxor.u32 %v1075, 2147483648
          %v1077 = vmul.f32 %v1076, 1.442695
          %v1078 = vpow.pop %v1077
          %v1079 = vadd.f32 %v1078, 1.0
          %v1080 = vrcp.pop %v1079
          %v1081 = vmul.f32 1.0, %v1080
          %v1082 = vtanh.pop %v1075
          %v1083 = vmul.f32 %v1081, %v994
          %1085 = vrot.lane.b32.xlu0 %v1082, 32
          %v1086 = vpop.permute.xlu0 %1085
          %v1088 = vmul.f32 %v1081, %v1086
          %1090 = vrot.lane.b32.xlu0 %v1088, 32
          %v1091 = vpop.permute.xlu0 %1090
          %v1093 = vadd.f32 %v1083, %v1091
          %v1094 = vtanh.pop %v1093
          %1096 = vrot.lane.b32.xlu0 %v1094, 32
          %v1097 = vpop.permute.xlu0 %1096
          %v1099 = vmul.f32 %v1081, %v1097
          %1101 = vrot.lane.b32.xlu0 %v1099, 64
          %v1102 = vpop.permute.xlu0 %1101
          %s1104 = scalar_lea.vmem [#allocation5], %s996
          %1105 = vst.msk [vmem:[%s1104] sm:$0xff] %vm1002, %v1102
        $region152: #{bert_bilstm_encoder_forward.1} parent=131 // loop_footer
          %s992 = sadd.s32 1, %s988
        $region153: #{bert_bilstm_encoder_forward.1} parent=131 // loop_footer_branch
          %987 = sbr.rel target = $region149
        $region154: #{bert_bilstm_encoder_forward.1} parent=131 // loop_exit
          _
        %v1106 = vld [vmem:[#allocation4] sm:$0xff]
        %v1107 = vld [vmem:[#allocation4 + $0x8] sm:$0xff]
        %v1108 = vld [vmem:[#allocation4 + $0x10] sm:$0xff]
        %v1109 = vld [vmem:[#allocation4 + $0x18] sm:$0xff]
        %v1110 = vld [vmem:[#allocation4 + $0x20] sm:$0xff]
        %v1111 = vld [vmem:[#allocation4 + $0x28] sm:$0xff]
        %v1112 = vld [vmem:[#allocation4 + $0x30] sm:$0xff]
        %v1113 = vld [vmem:[#allocation4 + $0x38] sm:$0xff]
        %v1114 = vmul.f32 %v1106, %v808
        %v1115 = vmul.f32 %v1107, %v813
        %v1116 = vmul.f32 %v1108, %v818
        %v1117 = vmul.f32 %v1109, %v823
        %v1118 = vmul.f32 %v1110, %v828
        %v1119 = vmul.f32 %v1111, %v833
        %v1120 = vmul.f32 %v1112, %v838
        %v1121 = vmul.f32 %v1113, %v843
        %v1122 = vld [vmem:[#allocation5] sm:$0xff]
        %v1123 = vld [vmem:[#allocation5 + $0x8] sm:$0xff]
        %v1124 = vld [vmem:[#allocation5 + $0x10] sm:$0xff]
        %v1125 = vld [vmem:[#allocation5 + $0x18] sm:$0xff]
        %v1126 = vld [vmem:[#allocation5 + $0x20] sm:$0xff]
        %v1127 = vld [vmem:[#allocation5 + $0x28] sm:$0xff]
        %v1128 = vld [vmem:[#allocation5 + $0x30] sm:$0xff]
        %v1129 = vld [vmem:[#allocation5 + $0x38] sm:$0xff]
        %v1130 = vld [vmem:[%s8] sm:$0xff]
        %v1131 = vld [vmem:[%s8 + $0x8] sm:$0xff]
        %v1132 = vld [vmem:[%s8 + $0x10] sm:$0xff]
        %v1133 = vld [vmem:[%s8 + $0x18] sm:$0xff]
        %v1134 = vld [vmem:[%s9] sm:$0xff]
        %v1135 = vld [vmem:[%s9 + $0x8] sm:$0xff]
        %v1136 = vld [vmem:[%s9 + $0x10] sm:$0xff]
        %v1137 = vld [vmem:[%s9 + $0x18] sm:$0xff]
        %vm1138 = vcmask 261120
        %v1140 = vsel %vm1138, %v1122, 0
        %v1143 = vsel %vm1138, %v1123, 0
        %v1146 = vsel %vm1138, %v1124, 0
        %v1149 = vsel %vm1138, %v1125, 0
        %v1152 = vsel %vm1138, %v1126, 0
        %v1155 = vsel %vm1138, %v1127, 0
        %v1158 = vsel %vm1138, %v1128, 0
        %v1161 = vsel %vm1138, %v1129, 0
        %1163 = vmatprep.subr.mxu0 0.0
        %1164 = vmatpush1.msra.mxu0 %v1134
        %1165 = vmatprep.subr.mxu0 0.0
        %1166 = vmatpush1.msra.mxu0 %v1135
        %1167 = vmatprep.subr.mxu0 0.0
        %1168 = vmatpush1.msra.mxu0 %v1136
        %1169 = vmatprep.subr.mxu0 0.0
        %1170 = vmatpush1.msra.mxu0 %v1137
        %1171 = vmatprep.subr.mxu0 0.0
        %1172 = vmatpush1.msra.mxu0 0.0
        %1173 = vmatprep.subr.mxu0 0.0
        %1174 = vmatpush1.msra.mxu0 0.0
        %1175 = vmatprep.subr.mxu0 0.0
        %1176 = vmatpush1.msra.mxu0 0.0
        %1177 = vmatprep.subr.mxu0 0.0
        %1178 = vmatpush1.msra.mxu0 0.0
        %1179 = vmatprep.subr.mxu0 0.0
        %1180 = vmatpush1.msra.mxu0 0.0
        %1181 = vmatprep.subr.mxu0 0.0
        %1182 = vmatpush1.msra.mxu0 0.0
        %1183 = vmatprep.subr.mxu0 0.0
        %1184 = vmatpush1.msra.mxu0 0.0
        %1185 = vmatprep.subr.mxu0 0.0
        %1186 = vmatpush1.msra.mxu0 0.0
        %1187 = vmatprep.subr.mxu0 0.0
        %1188 = vmatpush1.msra.mxu0 0.0
        %1189 = vmatprep.subr.mxu0 0.0
        %1190 = vmatpush1.msra.mxu0 0.0
        %1191 = vmatprep.subr.mxu0 0.0
        %1192 = vmatpush1.msra.mxu0 0.0
        %1193 = vmatprep.subr.mxu0 0.0
        %1194 = vmatpush1.msra.mxu0 0.0
        %1195 = vmatprep.subr.mxu0 0.0
        %1196 = vmatpush1.msra.mxu0 0.0
        %1197 = vmatprep.subr.mxu0 0.0
        %1198 = vmatpush1.msra.mxu0 0.0
        %1199 = vmatprep.subr.mxu0 0.0
        %1200 = vmatpush1.msra.mxu0 0.0
        %1201 = vmatprep.subr.mxu0 0.0
        %1202 = vmatpush1.msra.mxu0 0.0
        %1203 = vmatprep.subr.mxu0 0.0
        %1204 = vmatpush1.msra.mxu0 0.0
        %1205 = vmatprep.subr.mxu0 0.0
        %1206 = vmatpush1.msra.mxu0 0.0
        %1207 = vmatprep.subr.mxu0 0.0
        %1208 = vmatpush1.msra.mxu0 0.0
        %1209 = vmatprep.subr.mxu0 0.0
        %1210 = vmatpush1.msra.mxu0 0.0
        %1211 = vmatprep.subr.mxu0 0.0
        %1212 = vmatpush1.msra.mxu0 0.0
        %1213 = vmatprep.subr.mxu0 0.0
        %1214 = vmatpush1.msra.mxu0 0.0
        %1215 = vmatprep.subr.mxu0 0.0
        %1216 = vmatpush1.msra.mxu0 0.0
        %1217 = vmatprep.subr.mxu0 0.0
        %1218 = vmatpush1.msra.mxu0 0.0
        %1219 = vmatprep.subr.mxu0 0.0
        %1220 = vmatpush1.msra.mxu0 0.0
        %1221 = vmatprep.subr.mxu0 0.0
        %1222 = vmatpush1.msra.mxu0 0.0
        %1223 = vmatprep.subr.mxu0 0.0
        %1224 = vmatpush1.msra.mxu0 0.0
        %1225 = vmatprep.subr.mxu0 0.0
        %1226 = vmatpush1.msra.mxu0 0.0
        %1227 = vmatprep.mubr.f32.mxu0 0.0
        %1228 = vmatmul.mubr.f32.gmra.mrb[0].mxu0 %v1140
        %v1229 = vpop.f32.mrb[0].mxu0
        %v1230 = vadd.f32 0.0, %v1229
        %v1231 = vpop.f32.mrb[0].mxu0
        %1232 = vmatprep.mubr.f32.mxu0 0.0
        %1233 = vmatmul.mubr.f32.gmra.mrb[0].mxu0 %v1143
        %v1234 = vpop.f32.mrb[0].mxu0
        %v1235 = vadd.f32 0.0, %v1234
        %v1236 = vpop.f32.mrb[0].mxu0
        %1237 = vmatprep.mubr.f32.mxu0 0.0
        %1238 = vmatmul.mubr.f32.gmra.mrb[0].mxu0 %v1146
        %v1239 = vpop.f32.mrb[0].mxu0
        %v1240 = vadd.f32 0.0, %v1239
        %v1241 = vpop.f32.mrb[0].mxu0
        %1242 = vmatprep.mubr.f32.mxu0 0.0
        %1243 = vmatmul.mubr.f32.gmra.mrb[0].mxu0 %v1149
        %v1244 = vpop.f32.mrb[0].mxu0
        %v1245 = vadd.f32 0.0, %v1244
        %v1246 = vpop.f32.mrb[0].mxu0
        %1247 = vmatprep.mubr.f32.mxu0 0.0
        %1248 = vmatmul.mubr.f32.gmra.mrb[0].mxu0 %v1152
        %v1249 = vpop.f32.mrb[0].mxu0
        %v1250 = vadd.f32 0.0, %v1249
        %v1251 = vpop.f32.mrb[0].mxu0
        %1252 = vmatprep.mubr.f32.mxu0 0.0
        %1253 = vmatmul.mubr.f32.gmra.mrb[0].mxu0 %v1155
        %v1254 = vpop.f32.mrb[0].mxu0
        %v1255 = vadd.f32 0.0, %v1254
        %v1256 = vpop.f32.mrb[0].mxu0
        %1257 = vmatprep.mubr.f32.mxu0 0.0
        %1258 = vmatmul.mubr.f32.gmra.mrb[0].mxu0 %v1158
        %v1259 = vpop.f32.mrb[0].mxu0
        %v1260 = vadd.f32 0.0, %v1259
        %v1261 = vpop.f32.mrb[0].mxu0
        %1262 = vmatprep.mubr.f32.mxu0 0.0
        %1263 = vmatmul.mubr.f32.gmra.mrb[0].mxu0 %v1161
        %v1264 = vpop.f32.mrb[0].mxu0
        %v1265 = vadd.f32 0.0, %v1264
        %v1266 = vpop.f32.mrb[0].mxu0
        %1267 = vdwg.mxu0
        %v1269 = vsel %vm1138, %v1114, 0
        %v1272 = vsel %vm1138, %v1115, 0
        %v1275 = vsel %vm1138, %v1116, 0
        %v1278 = vsel %vm1138, %v1117, 0
        %v1281 = vsel %vm1138, %v1118, 0
        %v1284 = vsel %vm1138, %v1119, 0
        %v1287 = vsel %vm1138, %v1120, 0
        %v1290 = vsel %vm1138, %v1121, 0
        %1292 = vmatprep.subr.mxu0 0.0
        %1293 = vmatpush1.msra.mxu0 %v1130
        %1294 = vmatprep.subr.mxu0 0.0
        %1295 = vmatpush1.msra.mxu0 %v1131
        %1296 = vmatprep.subr.mxu0 0.0
        %1297 = vmatpush1.msra.mxu0 %v1132
        %1298 = vmatprep.subr.mxu0 0.0
        %1299 = vmatpush1.msra.mxu0 %v1133
        %1300 = vmatprep.subr.mxu0 0.0
        %1301 = vmatpush1.msra.mxu0 0.0
        %1302 = vmatprep.subr.mxu0 0.0
        %1303 = vmatpush1.msra.mxu0 0.0
        %1304 = vmatprep.subr.mxu0 0.0
        %1305 = vmatpush1.msra.mxu0 0.0
        %1306 = vmatprep.subr.mxu0 0.0
        %1307 = vmatpush1.msra.mxu0 0.0
        %1308 = vmatprep.subr.mxu0 0.0
        %1309 = vmatpush1.msra.mxu0 0.0
        %1310 = vmatprep.subr.mxu0 0.0
        %1311 = vmatpush1.msra.mxu0 0.0
        %1312 = vmatprep.subr.mxu0 0.0
        %1313 = vmatpush1.msra.mxu0 0.0
        %1314 = vmatprep.subr.mxu0 0.0
        %1315 = vmatpush1.msra.mxu0 0.0
        %1316 = vmatprep.subr.mxu0 0.0
        %1317 = vmatpush1.msra.mxu0 0.0
        %1318 = vmatprep.subr.mxu0 0.0
        %1319 = vmatpush1.msra.mxu0 0.0
        %1320 = vmatprep.subr.mxu0 0.0
        %1321 = vmatpush1.msra.mxu0 0.0
        %1322 = vmatprep.subr.mxu0 0.0
        %1323 = vmatpush1.msra.mxu0 0.0
        %1324 = vmatprep.subr.mxu0 0.0
        %1325 = vmatpush1.msra.mxu0 0.0
        %1326 = vmatprep.subr.mxu0 0.0
        %1327 = vmatpush1.msra.mxu0 0.0
        %1328 = vmatprep.subr.mxu0 0.0
        %1329 = vmatpush1.msra.mxu0 0.0
        %1330 = vmatprep.subr.mxu0 0.0
        %1331 = vmatpush1.msra.mxu0 0.0
        %1332 = vmatprep.subr.mxu0 0.0
        %1333 = vmatpush1.msra.mxu0 0.0
        %1334 = vmatprep.subr.mxu0 0.0
        %1335 = vmatpush1.msra.mxu0 0.0
        %1336 = vmatprep.subr.mxu0 0.0
        %1337 = vmatpush1.msra.mxu0 0.0
        %1338 = vmatprep.subr.mxu0 0.0
        %1339 = vmatpush1.msra.mxu0 0.0
        %1340 = vmatprep.subr.mxu0 0.0
        %1341 = vmatpush1.msra.mxu0 0.0
        %1342 = vmatprep.subr.mxu0 0.0
        %1343 = vmatpush1.msra.mxu0 0.0
        %1344 = vmatprep.subr.mxu0 0.0
        %1345 = vmatpush1.msra.mxu0 0.0
        %1346 = vmatprep.subr.mxu0 0.0
        %1347 = vmatpush1.msra.mxu0 0.0
        %1348 = vmatprep.subr.mxu0 0.0
        %1349 = vmatpush1.msra.mxu0 0.0
        %1350 = vmatprep.subr.mxu0 0.0
        %1351 = vmatpush1.msra.mxu0 0.0
        %1352 = vmatprep.subr.mxu0 0.0
        %1353 = vmatpush1.msra.mxu0 0.0
        %1354 = vmatprep.subr.mxu0 0.0
        %1355 = vmatpush1.msra.mxu0 0.0
        %1356 = vmatprep.mubr.f32.mxu0 0.0
        %1357 = vmatmul.mubr.f32.gmra.mrb[0].mxu0 %v1269
        %v1358 = vpop.f32.mrb[0].mxu0
        %v1359 = vadd.f32 %v1230, %v1358
        %v1360 = vpop.f32.mrb[0].mxu0
        %1361 = vmatprep.mubr.f32.mxu0 0.0
        %1362 = vmatmul.mubr.f32.gmra.mrb[0].mxu0 %v1272
        %v1363 = vpop.f32.mrb[0].mxu0
        %v1364 = vadd.f32 %v1235, %v1363
        %v1365 = vpop.f32.mrb[0].mxu0
        %1366 = vmatprep.mubr.f32.mxu0 0.0
        %1367 = vmatmul.mubr.f32.gmra.mrb[0].mxu0 %v1275
        %v1368 = vpop.f32.mrb[0].mxu0
        %v1369 = vadd.f32 %v1240, %v1368
        %v1370 = vpop.f32.mrb[0].mxu0
        %1371 = vmatprep.mubr.f32.mxu0 0.0
        %1372 = vmatmul.mubr.f32.gmra.mrb[0].mxu0 %v1278
        %v1373 = vpop.f32.mrb[0].mxu0
        %v1374 = vadd.f32 %v1245, %v1373
        %v1375 = vpop.f32.mrb[0].mxu0
        %1376 = vmatprep.mubr.f32.mxu0 0.0
        %1377 = vmatmul.mubr.f32.gmra.mrb[0].mxu0 %v1281
        %v1378 = vpop.f32.mrb[0].mxu0
        %v1379 = vadd.f32 %v1250, %v1378
        %v1380 = vpop.f32.mrb[0].mxu0
        %1381 = vmatprep.mubr.f32.mxu0 0.0
        %1382 = vmatmul.mubr.f32.gmra.mrb[0].mxu0 %v1284
        %v1383 = vpop.f32.mrb[0].mxu0
        %v1384 = vadd.f32 %v1255, %v1383
        %v1385 = vpop.f32.mrb[0].mxu0
        %1386 = vmatprep.mubr.f32.mxu0 0.0
        %1387 = vmatmul.mubr.f32.gmra.mrb[0].mxu0 %v1287
        %v1388 = vpop.f32.mrb[0].mxu0
        %v1389 = vadd.f32 %v1260, %v1388
        %v1390 = vpop.f32.mrb[0].mxu0
        %1391 = vmatprep.mubr.f32.mxu0 0.0
        %1392 = vmatmul.mubr.f32.gmra.mrb[0].mxu0 %v1290
        %v1393 = vpop.f32.mrb[0].mxu0
        %v1394 = vadd.f32 %v1265, %v1393
        %v1395 = vpop.f32.mrb[0].mxu0
        %1396 = vdwg.mxu0
        %v1397 = vld [vmem:[%s10] sm:$0x1]
        %v1399 = vlaneseq
        %v1400 = vshrl.u32 %v1399, 7
        %v1401 = vsub.s32 0, %v1400
        %v1402 = vrot.slane %v1397, %v1401
        %v1404 = vadd.f32 %v1359, %v1402
        %v1405 = vadd.f32 %v1364, %v1402
        %v1406 = vadd.f32 %v1369, %v1402
        %v1407 = vadd.f32 %v1374, %v1402
        %v1408 = vadd.f32 %v1379, %v1402
        %v1409 = vadd.f32 %v1384, %v1402
        %v1410 = vadd.f32 %v1389, %v1402
        %v1411 = vadd.f32 %v1394, %v1402
        %1412 = vst [vmem:[%s524] sm:$0xff] %v1404
        %1413 = vst [vmem:[%s524 + $0x8] sm:$0xff] %v1405
        %1414 = vst [vmem:[%s524 + $0x10] sm:$0xff] %v1406
        %1415 = vst [vmem:[%s524 + $0x18] sm:$0xff] %v1407
        %1416 = vst [vmem:[%s524 + $0x20] sm:$0xff] %v1408
        %1417 = vst [vmem:[%s524 + $0x28] sm:$0xff] %v1409
        %1418 = vst [vmem:[%s524 + $0x30] sm:$0xff] %v1410
        %1419 = vst [vmem:[%s524 + $0x38] sm:$0xff] %v1411
        %s1420 = sand.u32 %s271, 1
        %s1421 = sand.u32 %s271, 1
        %s1422 = smul.addr %s1421, 64
        %s1423 = scalar_lea.vmem [#allocation8], %s1422
        // Predicated region
        $region155: #{bert_bilstm_encoder_forward.1} parent=131 // pred_check
          %p1424 = pneg %p281
        $region156: #{bert_bilstm_encoder_forward.1} parent=131 // pred_check_branch
          %1426 = sbr.rel (%p1424) target = $region158
        $region157: #{bert_bilstm_encoder_forward.1} parent=131 // pred_region
          %s1427 = smul.addr %s22, 8
          %s1428 = scalar_lea.vmem %s11, %s1427
          // Predicated region
          $region159: #{bert_bilstm_encoder_forward.1} parent=157 // pred_check
            _
          $region160: #{bert_bilstm_encoder_forward.1} parent=157 // pred_check_branch
            %1430 = sbr.rel (0) target = $region162
          $region161: #{bert_bilstm_encoder_forward.1} parent=157 // pred_region
            // Predicated region
            $region163: #{bert_bilstm_encoder_forward.1} parent=161 // pred_check
              _
            $region164: #{bert_bilstm_encoder_forward.1} parent=161 // pred_check_branch
              %1432 = sbr.rel (0) target = $region166
            $region165: #{bert_bilstm_encoder_forward.1} parent=161 // pred_region
              // Predicated region
              $region178: #{bert_bilstm_encoder_forward.1} parent=165 // pred_check
                _
              $region179: #{bert_bilstm_encoder_forward.1} parent=165 // pred_check_branch
                %1461 = sbr.rel (0) target = $region181
              $region180: #{bert_bilstm_encoder_forward.1} parent=165 // pred_region
                loop: start=0, step=1, limit=1
                $region182: #{bert_bilstm_encoder_forward.1} parent=180 // loop_pre_header
                  _
                $region183: #{bert_bilstm_encoder_forward.1} parent=180 // loop_header
                  %s1463 = sphi 0, %s1467
                  %p1464 = scmp.ge.s32.totalorder %s1463, 1
                  %s1468 = sphi %s1423, %s1423
                  %s1469 = sphi %s1428, %s1428
                $region184: #{bert_bilstm_encoder_forward.1} parent=180 // loop_header_branch
                  %1466 = sbr.rel (%p1464) target = $region188
                $region185: #{bert_bilstm_encoder_forward.1} parent=180 // loop_body
                  %v1470 = vld [vmem:[%s1468] sm:$0xff]
                  %1471 = vst [vmem:[%s1469] sm:$0xff] %v1470
                  %v1472 = vld [vmem:[%s1468 + $0x8] sm:$0xff]
                  %1473 = vst [vmem:[%s1469 + $0x10] sm:$0xff] %v1472
                  %v1474 = vld [vmem:[%s1468 + $0x10] sm:$0xff]
                  %1475 = vst [vmem:[%s1469 + $0x20] sm:$0xff] %v1474
                  %v1476 = vld [vmem:[%s1468 + $0x18] sm:$0xff]
                  %1477 = vst [vmem:[%s1469 + $0x30] sm:$0xff] %v1476
                  %v1478 = vld [vmem:[%s1468 + $0x20] sm:$0xff]
                  %1479 = vst [vmem:[%s1469 + $0x40] sm:$0xff] %v1478
                  %v1480 = vld [vmem:[%s1468 + $0x28] sm:$0xff]
                  %1481 = vst [vmem:[%s1469 + $0x50] sm:$0xff] %v1480
                  %v1482 = vld [vmem:[%s1468 + $0x30] sm:$0xff]
                  %1483 = vst [vmem:[%s1469 + $0x60] sm:$0xff] %v1482
                  %v1484 = vld [vmem:[%s1468 + $0x38] sm:$0xff]
                  %1485 = vst [vmem:[%s1469 + $0x70] sm:$0xff] %v1484
                $region186: #{bert_bilstm_encoder_forward.1} parent=180 // loop_footer
                  %s1467 = sadd.s32 1, %s1463
                $region187: #{bert_bilstm_encoder_forward.1} parent=180 // loop_footer_branch
                  %1462 = sbr.rel target = $region183
                $region188: #{bert_bilstm_encoder_forward.1} parent=180 // loop_exit
                  _
              $region181: #{bert_bilstm_encoder_forward.1} parent=165 // pred_fallthru
                _
              // Predicated region
              $region189: #{bert_bilstm_encoder_forward.1} parent=165 // pred_check
                _
              $region190: #{bert_bilstm_encoder_forward.1} parent=165 // pred_check_branch
                %1487 = sbr.rel target = $region192
              $region191: #{bert_bilstm_encoder_forward.1} parent=165 // pred_region
                _
              $region192: #{bert_bilstm_encoder_forward.1} parent=165 // pred_fallthru
                _
            $region166: #{bert_bilstm_encoder_forward.1} parent=161 // pred_fallthru
              _
            // Predicated region
            $region167: #{bert_bilstm_encoder_forward.1} parent=161 // pred_check
              _
            $region168: #{bert_bilstm_encoder_forward.1} parent=161 // pred_check_branch
              %1434 = sbr.rel target = $region170
            $region169: #{bert_bilstm_encoder_forward.1} parent=161 // pred_region
              loop: start=0, step=1, limit=1
              $region171: #{bert_bilstm_encoder_forward.1} parent=169 // loop_pre_header
                _
              $region172: #{bert_bilstm_encoder_forward.1} parent=169 // loop_header
                %s1437 = sphi 0, %s1441
                %p1438 = scmp.ge.s32.totalorder %s1437, 1
                %s1442 = sphi %s1423, %s1423
                %s1443 = sphi %s1428, %s1428
              $region173: #{bert_bilstm_encoder_forward.1} parent=169 // loop_header_branch
                %1440 = sbr.rel (%p1438) target = $region177
              $region174: #{bert_bilstm_encoder_forward.1} parent=169 // loop_body
                %v1444 = vld [vmem:[%s1442] sm:$0xff]
                %1445 = vst [vmem:[%s1443] sm:$0xff] %v1444
                %v1446 = vld [vmem:[%s1442 + $0x8] sm:$0xff]
                %1447 = vst [vmem:[%s1443 + $0x10] sm:$0xff] %v1446
                %v1448 = vld [vmem:[%s1442 + $0x10] sm:$0xff]
                %1449 = vst [vmem:[%s1443 + $0x20] sm:$0xff] %v1448
                %v1450 = vld [vmem:[%s1442 + $0x18] sm:$0xff]
                %1451 = vst [vmem:[%s1443 + $0x30] sm:$0xff] %v1450
                %v1452 = vld [vmem:[%s1442 + $0x20] sm:$0xff]
                %1453 = vst [vmem:[%s1443 + $0x40] sm:$0xff] %v1452
                %v1454 = vld [vmem:[%s1442 + $0x28] sm:$0xff]
                %1455 = vst [vmem:[%s1443 + $0x50] sm:$0xff] %v1454
                %v1456 = vld [vmem:[%s1442 + $0x30] sm:$0xff]
                %1457 = vst [vmem:[%s1443 + $0x60] sm:$0xff] %v1456
                %v1458 = vld [vmem:[%s1442 + $0x38] sm:$0xff]
                %1459 = vst [vmem:[%s1443 + $0x70] sm:$0xff] %v1458
              $region175: #{bert_bilstm_encoder_forward.1} parent=169 // loop_footer
                %s1441 = sadd.s32 1, %s1437
              $region176: #{bert_bilstm_encoder_forward.1} parent=169 // loop_footer_branch
                %1436 = sbr.rel target = $region172
              $region177: #{bert_bilstm_encoder_forward.1} parent=169 // loop_exit
                _
            $region170: #{bert_bilstm_encoder_forward.1} parent=161 // pred_fallthru
              _
          $region162: #{bert_bilstm_encoder_forward.1} parent=157 // pred_fallthru
            _
          %1488 = vnop
        $region158: #{bert_bilstm_encoder_forward.1} parent=131 // pred_fallthru
          _
      $region132: #{bert_bilstm_encoder_forward.1} parent=5 // pred_fallthru
        _
      %p1489 = scmp.le.s32.totalorder 2, %s17
      // Predicated region
      $region193: #{bert_bilstm_encoder_forward.1} parent=5 // pred_check
        %p1490 = pneg %p1489
      $region194: #{bert_bilstm_encoder_forward.1} parent=5 // pred_check_branch
        %1492 = sbr.rel (%p1490) target = $region196
      $region195: #{bert_bilstm_encoder_forward.1} parent=5 // pred_region
        %s1493 = ssub.s32 %s17, 2
        // Predicated region
        $region197: #{bert_bilstm_encoder_forward.1} parent=195 // pred_check
          %p1494 = pneg %p287
        $region198: #{bert_bilstm_encoder_forward.1} parent=195 // pred_check_branch
          %1496 = sbr.rel (%p1494) target = $region200
        $region199: #{bert_bilstm_encoder_forward.1} parent=195 // pred_region
          %s1497 = sand.u32 %s272, 1
          %s1498 = sand.u32 %s272, 1
          %s1499 = smul.addr %s1498, 64
          %s1500 = scalar_lea.vmem [#allocation8], %s1499
        $region200: #{bert_bilstm_encoder_forward.1} parent=195 // pred_fallthru
          _
      $region196: #{bert_bilstm_encoder_forward.1} parent=5 // pred_fallthru
        _
    $region6: #{bert_bilstm_encoder_forward.1} parent=1 // loop_footer
      %s21 = sadd.s32 1, %s17
    $region7: #{bert_bilstm_encoder_forward.1} parent=1 // loop_footer_branch
      %16 = sbr.rel target = $region3
    $region8: #{bert_bilstm_encoder_forward.1} parent=1 // loop_exit
      _

</llo_original>
